<compile_context>
chip_gen: v7x
topology: tpu7x:2x2x1
jax: 0.10.0
libtpu: 0.0.40
codegen_flags: <defaults>
</compile_context>

<pallas_src>
import jax
import jax.numpy as jnp
from jax.experimental import pallas as pl
from jax.experimental.pallas import tpu as pltpu


# MLP layer sizes (in, out) matching the PyTorch module.
LAYER_DIMS = [(784, 128), (128, 64), (64, 32), (32, 64), (64, 128), (128, 784)]

FEAT = 784
FEAT_PAD = 896        # 7 * 128 -> lane-dense first/last matmul and output stores


def _round_up(x, m):
    return (x + m - 1) // m * m


def autoencoder_kernel(x_ref,
                       w1, b1, w2, b2, w34, b34, w5, b5, w6, b6,
                       out_ref):
    """Encoder+decoder forward for one batch tile; all weights resident in VMEM.

    Matmuls run with bf16 operands on the MXU (f32 accumulate); bias add and
    activations stay in f32 (v5e has no bf16 VPU/EUP path).
    """
    h = x_ref[...]                                           # bf16 (tile, 896)

    def dense(h_bf16, w_ref, b_ref):
        # bf16 x bf16 -> f32 accumulate on the MXU, f32 bias broadcast-add.
        return jnp.dot(h_bf16, w_ref[...],
                       preferred_element_type=jnp.float32) + b_ref[...]

    # ---- encoder ----
    h = jnp.maximum(dense(h, w1, b1), 0.0)                   # 896 -> 128, ReLU
    h = jnp.maximum(dense(h.astype(jnp.bfloat16), w2, b2), 0.0)   # 128 -> 64, ReLU
    # ---- fused encoder L3 + decoder L1 (exact: no activation on the latent) ----
    h = jnp.maximum(dense(h.astype(jnp.bfloat16), w34, b34), 0.0)  # 64 -> 64, ReLU
    # ---- decoder ----
    h = jnp.maximum(dense(h.astype(jnp.bfloat16), w5, b5), 0.0)    # 64 -> 128, ReLU
    h = dense(h.astype(jnp.bfloat16), w6, b6)                      # 128 -> 896
    # Sigmoid via EUP exp + approx reciprocal (keeps the VPU slot free).
    h = pl.reciprocal(1.0 + jnp.exp(-h), approx=True)

    out_ref[...] = h.astype(out_ref.dtype)


def init_params(key):
    """Deterministic PyTorch-style init: U(-1/sqrt(fan_in), 1/sqrt(fan_in))."""
    params = []
    for (fan_in, fan_out) in LAYER_DIMS:
        key, kw, kb = jax.random.split(key, 3)
        bound = 1.0 / jnp.sqrt(jnp.float32(fan_in))
        w = jax.random.uniform(kw, (fan_in, fan_out), jnp.float32, -bound, bound)
        b = jax.random.uniform(kb, (1, fan_out), jnp.float32, -bound, bound)
        params.append((w, b))
    return params


def prepare_params(params):
    """Fuse the activation-free 64->32->64 pair, pad 784->896, cast W to bf16."""
    (w1, b1), (w2, b2), (w3, b3), (w4, b4), (w5, b5), (w6, b6) = params

    # Exact fusion: no activation on the 32-d latent.
    w34 = w3 @ w4                                   # (64, 64)
    b34 = b3 @ w4 + b4                              # (1, 64)

    # Zero-pad the 784-feature edges to 896 (padded rows/cols contribute zero).
    w1p = jnp.zeros((FEAT_PAD, w1.shape[1]), jnp.float32).at[:FEAT, :].set(w1)
    w6p = jnp.zeros((w6.shape[0], FEAT_PAD), jnp.float32).at[:, :FEAT].set(w6)
    b6p = jnp.zeros((1, FEAT_PAD), jnp.float32).at[:, :FEAT].set(b6)

    flat = []
    for w, b in [(w1p, b1), (w2, b2), (w34, b34), (w5, b5), (w6p, b6p)]:
        flat += [w.astype(jnp.bfloat16), b.astype(jnp.float32)]
    return flat


def autoencoder_forward(x_nchw, params, *, batch_tile=512):
    """x_nchw: (B, 1, 28, 28) float32 -> (B, 784) float32 reconstruction."""
    B = x_nchw.shape[0]
    x = x_nchw.reshape(B, -1).astype(jnp.float32)   # x.view(x.size(0), -1)
    assert x.shape[1] == FEAT, f"expected {FEAT} features, got {x.shape[1]}"

    flat_params = prepare_params(params)

    # Batch tile: multiple of 16 (bf16 sublane packing), capped by the batch so
    # tiny batches do not do padded work; batch padded up to a tile multiple.
    tile = min(batch_tile, max(16, _round_up(B, 16)))
    tile = _round_up(tile, 16)
    Bp = _round_up(B, tile)

    xp = jnp.zeros((Bp, FEAT_PAD), jnp.float32).at[:B, :FEAT].set(x)
    xp = xp.astype(jnp.bfloat16)

    x_spec = pl.BlockSpec((tile, FEAT_PAD), lambda i: (i, 0))
    # Weights / biases: full-array blocks with a constant index_map (loaded once,
    # never re-fetched across the batch grid).
    param_specs = [pl.BlockSpec(p.shape, lambda i: (0, 0)) for p in flat_params]
    out_spec = pl.BlockSpec((tile, FEAT_PAD), lambda i: (i, 0))

    out = pl.pallas_call(
        autoencoder_kernel,
        out_shape=jax.ShapeDtypeStruct((Bp, FEAT_PAD), jnp.float32),
        grid_spec=pltpu.PrefetchScalarGridSpec(
            num_scalar_prefetch=0,
            grid=(Bp // tile,),
            in_specs=[x_spec] + param_specs,
            out_specs=out_spec,
        ),
        compiler_params=pltpu.CompilerParams(
            dimension_semantics=("parallel",),      # shards across TCs on v7x
            vmem_limit_bytes=48 * 1024 * 1024,      # safe on v5e/v6e/v7x
        ),
    )(xp, *flat_params)

    return out[:B, :FEAT]


def reference_forward(x_nchw, params):
    """Pure-JAX f32 reference (unfused) for correctness checking."""
    h = x_nchw.reshape(x_nchw.shape[0], -1).astype(jnp.float32)
    acts = ["relu", "relu", "none", "relu", "relu", "sigmoid"]
    for (w, b), act in zip(params, acts):
        h = h @ w + b
        if act == "relu":
            h = jnp.maximum(h, 0.0)
        elif act == "sigmoid":
            h = jax.nn.sigmoid(h)
    return h


if __name__ == "__main__":
    key = jax.random.PRNGKey(0)
    key, pkey, xkey = jax.random.split(key, 3)

    params = init_params(pkey)

    # Small MNIST-like batch, deliberately not a multiple of the tile size to
    # exercise the batch-padding path: (B, 1, 28, 28) in NCHW.
    B = 100
    x = jax.random.uniform(xkey, (B, 1, 28, 28), jnp.float32)

    out = autoencoder_forward(x, params)
    out = jax.block_until_ready(out)

    ref = reference_forward(x, params)
    assert out.shape == (B, 784)
    # bf16 matmul operands + approx reciprocal vs. f32 reference -> loose tol.
    assert jnp.allclose(out, ref, atol=2e-2, rtol=2e-2), "mismatch vs reference"

    print("KERNEL_OK")
</pallas_src>

<mosaic_0001>
module attributes {stable_mosaic.version = 11 : i64} {
  func.func @autoencoder_kernel(%arg0: i32, %arg1: memref<112x896xbf16, #tpu.memory_space<vmem>>, %arg2: memref<896x128xbf16, #tpu.memory_space<vmem>>, %arg3: memref<1x128xf32, #tpu.memory_space<vmem>>, %arg4: memref<128x64xbf16, #tpu.memory_space<vmem>>, %arg5: memref<1x64xf32, #tpu.memory_space<vmem>>, %arg6: memref<64x64xbf16, #tpu.memory_space<vmem>>, %arg7: memref<1x64xf32, #tpu.memory_space<vmem>>, %arg8: memref<64x128xbf16, #tpu.memory_space<vmem>>, %arg9: memref<1x128xf32, #tpu.memory_space<vmem>>, %arg10: memref<128x896xbf16, #tpu.memory_space<vmem>>, %arg11: memref<1x896xf32, #tpu.memory_space<vmem>>, %arg12: memref<112x896xf32, #tpu.memory_space<vmem>>) attributes {dimension_semantics = [#tpu.dimension_semantics<parallel>], iteration_bounds = array<i64: 1>, scalar_prefetch = 0 : i64, scratch_operands = 0 : i64, tpu.core_type = #tpu.core_type<tc>, window_params = [{transform_indices = @transform_0, window_bounds = array<i64: 112, 896>}, {pipeline_mode = #tpu.pipeline_mode<synchronous>, transform_indices = @transform_1, window_bounds = array<i64: 896, 128>}, {pipeline_mode = #tpu.pipeline_mode<synchronous>, transform_indices = @transform_2, window_bounds = array<i64: 1, 128>}, {pipeline_mode = #tpu.pipeline_mode<synchronous>, transform_indices = @transform_3, window_bounds = array<i64: 128, 64>}, {pipeline_mode = #tpu.pipeline_mode<synchronous>, transform_indices = @transform_4, window_bounds = array<i64: 1, 64>}, {pipeline_mode = #tpu.pipeline_mode<synchronous>, transform_indices = @transform_5, window_bounds = array<i64: 64, 64>}, {pipeline_mode = #tpu.pipeline_mode<synchronous>, transform_indices = @transform_6, window_bounds = array<i64: 1, 64>}, {pipeline_mode = #tpu.pipeline_mode<synchronous>, transform_indices = @transform_7, window_bounds = array<i64: 64, 128>}, {pipeline_mode = #tpu.pipeline_mode<synchronous>, transform_indices = @transform_8, window_bounds = array<i64: 1, 128>}, {pipeline_mode = #tpu.pipeline_mode<synchronous>, transform_indices = @transform_9, window_bounds = array<i64: 128, 896>}, {pipeline_mode = #tpu.pipeline_mode<synchronous>, transform_indices = @transform_10, window_bounds = array<i64: 1, 896>}, {transform_indices = @transform_11, window_bounds = array<i64: 112, 896>}]} {
    %c0 = arith.constant 0 : index
    %c0_0 = arith.constant 0 : index
    %0 = vector.load %arg1[%c0, %c0_0] : memref<112x896xbf16, #tpu.memory_space<vmem>>, vector<112x896xbf16>
    %c0_1 = arith.constant 0 : index
    %c0_2 = arith.constant 0 : index
    %1 = vector.load %arg2[%c0_1, %c0_2] : memref<896x128xbf16, #tpu.memory_space<vmem>>, vector<896x128xbf16>
    %cst = arith.constant dense<0.000000e+00> : vector<112x128xf32>
    %2 = tpu.matmul %0, %1, %cst {dimension_numbers = #tpu.dot_dimension_numbers<[1], [0], [0], [1], [0, 0, 1, 1], [], []>} : vector<112x896xbf16>, vector<896x128xbf16>, vector<112x128xf32> -> vector<112x128xf32>
    %c0_3 = arith.constant 0 : index
    %c0_4 = arith.constant 0 : index
    %3 = vector.load %arg3[%c0_3, %c0_4] : memref<1x128xf32, #tpu.memory_space<vmem>>, vector<1x128xf32>
    %4 = vector.broadcast %3 : vector<1x128xf32> to vector<112x128xf32>
    %5 = arith.addf %2, %4 : vector<112x128xf32>
    %cst_5 = arith.constant 0.000000e+00 : f32
    %6 = vector.broadcast %cst_5 : f32 to vector<112x128xf32>
    %7 = arith.maximumf %5, %6 : vector<112x128xf32>
    %8 = arith.truncf %7 : vector<112x128xf32> to vector<112x128xbf16>
    %c0_6 = arith.constant 0 : index
    %c0_7 = arith.constant 0 : index
    %9 = vector.load %arg4[%c0_6, %c0_7] : memref<128x64xbf16, #tpu.memory_space<vmem>>, vector<128x64xbf16>
    %cst_8 = arith.constant dense<0.000000e+00> : vector<112x64xf32>
    %10 = tpu.matmul %8, %9, %cst_8 {dimension_numbers = #tpu.dot_dimension_numbers<[1], [0], [0], [1], [0, 0, 1, 1], [], []>} : vector<112x128xbf16>, vector<128x64xbf16>, vector<112x64xf32> -> vector<112x64xf32>
    %c0_9 = arith.constant 0 : index
    %c0_10 = arith.constant 0 : index
    %11 = vector.load %arg5[%c0_9, %c0_10] : memref<1x64xf32, #tpu.memory_space<vmem>>, vector<1x64xf32>
    %12 = vector.broadcast %11 : vector<1x64xf32> to vector<112x64xf32>
    %13 = arith.addf %10, %12 : vector<112x64xf32>
    %cst_11 = arith.constant 0.000000e+00 : f32
    %14 = vector.broadcast %cst_11 : f32 to vector<112x64xf32>
    %15 = arith.maximumf %13, %14 : vector<112x64xf32>
    %16 = arith.truncf %15 : vector<112x64xf32> to vector<112x64xbf16>
    %c0_12 = arith.constant 0 : index
    %c0_13 = arith.constant 0 : index
    %17 = vector.load %arg6[%c0_12, %c0_13] : memref<64x64xbf16, #tpu.memory_space<vmem>>, vector<64x64xbf16>
    %cst_14 = arith.constant dense<0.000000e+00> : vector<112x64xf32>
    %18 = tpu.matmul %16, %17, %cst_14 {dimension_numbers = #tpu.dot_dimension_numbers<[1], [0], [0], [1], [0, 0, 1, 1], [], []>} : vector<112x64xbf16>, vector<64x64xbf16>, vector<112x64xf32> -> vector<112x64xf32>
    %c0_15 = arith.constant 0 : index
    %c0_16 = arith.constant 0 : index
    %19 = vector.load %arg7[%c0_15, %c0_16] : memref<1x64xf32, #tpu.memory_space<vmem>>, vector<1x64xf32>
    %20 = vector.broadcast %19 : vector<1x64xf32> to vector<112x64xf32>
    %21 = arith.addf %18, %20 : vector<112x64xf32>
    %cst_17 = arith.constant 0.000000e+00 : f32
    %22 = vector.broadcast %cst_17 : f32 to vector<112x64xf32>
    %23 = arith.maximumf %21, %22 : vector<112x64xf32>
    %24 = arith.truncf %23 : vector<112x64xf32> to vector<112x64xbf16>
    %c0_18 = arith.constant 0 : index
    %c0_19 = arith.constant 0 : index
    %25 = vector.load %arg8[%c0_18, %c0_19] : memref<64x128xbf16, #tpu.memory_space<vmem>>, vector<64x128xbf16>
    %cst_20 = arith.constant dense<0.000000e+00> : vector<112x128xf32>
    %26 = tpu.matmul %24, %25, %cst_20 {dimension_numbers = #tpu.dot_dimension_numbers<[1], [0], [0], [1], [0, 0, 1, 1], [], []>} : vector<112x64xbf16>, vector<64x128xbf16>, vector<112x128xf32> -> vector<112x128xf32>
    %c0_21 = arith.constant 0 : index
    %c0_22 = arith.constant 0 : index
    %27 = vector.load %arg9[%c0_21, %c0_22] : memref<1x128xf32, #tpu.memory_space<vmem>>, vector<1x128xf32>
    %28 = vector.broadcast %27 : vector<1x128xf32> to vector<112x128xf32>
    %29 = arith.addf %26, %28 : vector<112x128xf32>
    %cst_23 = arith.constant 0.000000e+00 : f32
    %30 = vector.broadcast %cst_23 : f32 to vector<112x128xf32>
    %31 = arith.maximumf %29, %30 : vector<112x128xf32>
    %32 = arith.truncf %31 : vector<112x128xf32> to vector<112x128xbf16>
    %c0_24 = arith.constant 0 : index
    %c0_25 = arith.constant 0 : index
    %33 = vector.load %arg10[%c0_24, %c0_25] : memref<128x896xbf16, #tpu.memory_space<vmem>>, vector<128x896xbf16>
    %cst_26 = arith.constant dense<0.000000e+00> : vector<112x896xf32>
    %34 = tpu.matmul %32, %33, %cst_26 {dimension_numbers = #tpu.dot_dimension_numbers<[1], [0], [0], [1], [0, 0, 1, 1], [], []>} : vector<112x128xbf16>, vector<128x896xbf16>, vector<112x896xf32> -> vector<112x896xf32>
    %c0_27 = arith.constant 0 : index
    %c0_28 = arith.constant 0 : index
    %35 = vector.load %arg11[%c0_27, %c0_28] : memref<1x896xf32, #tpu.memory_space<vmem>>, vector<1x896xf32>
    %36 = vector.broadcast %35 : vector<1x896xf32> to vector<112x896xf32>
    %37 = arith.addf %34, %36 : vector<112x896xf32>
    %cst_29 = arith.constant 0.000000e+00 : f32
    %38 = vector.broadcast %cst_29 : f32 to vector<112x896xf32>
    %39 = arith.subf %38, %37 : vector<112x896xf32>
    %40 = math.exp %39 : vector<112x896xf32>
    %cst_30 = arith.constant 1.000000e+00 : f32
    %41 = vector.broadcast %cst_30 : f32 to vector<112x896xf32>
    %42 = arith.addf %41, %40 : vector<112x896xf32>
    %43 = tpu.reciprocal %42 {approx = true} : vector<112x896xf32> -> vector<112x896xf32>
    %c0_31 = arith.constant 0 : index
    %c0_32 = arith.constant 0 : index
    %44 = vector.load %arg12[%c0_31, %c0_32] : memref<112x896xf32, #tpu.memory_space<vmem>>, vector<112x896xf32>
    tpu.vector_store %arg12[%c0_31, %c0_32], %43 {strides = array<i32>} : memref<112x896xf32, #tpu.memory_space<vmem>>, vector<112x896xf32>,
    return
  }
  func.func @transform_0(%arg0: i32) -> (i32, i32) {
    %c0_i32 = arith.constant 0 : i32
    %c0_i32_0 = arith.constant 0 : i32
    return %arg0, %c0_i32 : i32, i32
  }
  func.func @transform_1(%arg0: i32) -> (i32, i32) {
    %c0_i32 = arith.constant 0 : i32
    %c0_i32_0 = arith.constant 0 : i32
    %c0_i32_1 = arith.constant 0 : i32
    return %c0_i32, %c0_i32_0 : i32, i32
  }
  func.func @transform_2(%arg0: i32) -> (i32, i32) {
    %c0_i32 = arith.constant 0 : i32
    %c0_i32_0 = arith.constant 0 : i32
    %c0_i32_1 = arith.constant 0 : i32
    return %c0_i32, %c0_i32_0 : i32, i32
  }
  func.func @transform_3(%arg0: i32) -> (i32, i32) {
    %c0_i32 = arith.constant 0 : i32
    %c0_i32_0 = arith.constant 0 : i32
    %c0_i32_1 = arith.constant 0 : i32
    return %c0_i32, %c0_i32_0 : i32, i32
  }
  func.func @transform_4(%arg0: i32) -> (i32, i32) {
    %c0_i32 = arith.constant 0 : i32
    %c0_i32_0 = arith.constant 0 : i32
    %c0_i32_1 = arith.constant 0 : i32
    return %c0_i32, %c0_i32_0 : i32, i32
  }
  func.func @transform_5(%arg0: i32) -> (i32, i32) {
    %c0_i32 = arith.constant 0 : i32
    %c0_i32_0 = arith.constant 0 : i32
    %c0_i32_1 = arith.constant 0 : i32
    return %c0_i32, %c0_i32_0 : i32, i32
  }
  func.func @transform_6(%arg0: i32) -> (i32, i32) {
    %c0_i32 = arith.constant 0 : i32
    %c0_i32_0 = arith.constant 0 : i32
    %c0_i32_1 = arith.constant 0 : i32
    return %c0_i32, %c0_i32_0 : i32, i32
  }
  func.func @transform_7(%arg0: i32) -> (i32, i32) {
    %c0_i32 = arith.constant 0 : i32
    %c0_i32_0 = arith.constant 0 : i32
    %c0_i32_1 = arith.constant 0 : i32
    return %c0_i32, %c0_i32_0 : i32, i32
  }
  func.func @transform_8(%arg0: i32) -> (i32, i32) {
    %c0_i32 = arith.constant 0 : i32
    %c0_i32_0 = arith.constant 0 : i32
    %c0_i32_1 = arith.constant 0 : i32
    return %c0_i32, %c0_i32_0 : i32, i32
  }
  func.func @transform_9(%arg0: i32) -> (i32, i32) {
    %c0_i32 = arith.constant 0 : i32
    %c0_i32_0 = arith.constant 0 : i32
    %c0_i32_1 = arith.constant 0 : i32
    return %c0_i32, %c0_i32_0 : i32, i32
  }
  func.func @transform_10(%arg0: i32) -> (i32, i32) {
    %c0_i32 = arith.constant 0 : i32
    %c0_i32_0 = arith.constant 0 : i32
    %c0_i32_1 = arith.constant 0 : i32
    return %c0_i32, %c0_i32_0 : i32, i32
  }
  func.func @transform_11(%arg0: i32) -> (i32, i32) {
    %c0_i32 = arith.constant 0 : i32
    %c0_i32_0 = arith.constant 0 : i32
    return %arg0, %c0_i32 : i32, i32
  }
}

</mosaic_0001>

<llo_original>
// kernel: tpu_custom_call.1
$region0: #{tpu_custom_call.1}
  #allocation0 [shape = 'u32[]', space=smem, size = 0x4, offset = 0x4, fixed_abs, tag = 'smem constant byte address 0x4 - core index']
  #allocation1 [shape = 'u32[144,128]{1,0:T(1,128)}', space=vmem, size = 0x12000, scoped, tag = 'internal scratch']
  %s0 = inlined_call_operand.hbm [shape: bf16[112,896], index: 0, kind: input, shape index: {}]
  %s1 = inlined_call_operand.hbm [shape: bf16[896,128], index: 1, kind: input, shape index: {}]
  %s2 = inlined_call_operand.vmem [shape: f32[1,128], index: 2, kind: input, shape index: {}]
  %s3 = inlined_call_operand.vmem [shape: bf16[128,64], index: 3, kind: input, shape index: {}]
  %s4 = inlined_call_operand.vmem [shape: f32[1,64], index: 4, kind: input, shape index: {}]
  %s5 = inlined_call_operand.vmem [shape: bf16[64,64], index: 5, kind: input, shape index: {}]
  %s6 = inlined_call_operand.vmem [shape: f32[1,64], index: 6, kind: input, shape index: {}]
  %s7 = inlined_call_operand.vmem [shape: bf16[64,128], index: 7, kind: input, shape index: {}]
  %s8 = inlined_call_operand.vmem [shape: f32[1,128], index: 8, kind: input, shape index: {}]
  %s9 = inlined_call_operand.hbm [shape: bf16[128,896], index: 9, kind: input, shape index: {}]
  %s10 = inlined_call_operand.vmem [shape: f32[1,896], index: 10, kind: input, shape index: {}]
  %s11 = inlined_call_operand.hbm [shape: f32[112,896], index: 11, kind: output, shape index: {}]
  %s12 = sld [smem:[#allocation0]]
  $region66: #{tpu_custom_call.1} parent=0
    _
  %s14 = ssub.s32 1, %s12
  %s15 = scalar_select 0, %s14, %s12
  $region1: #{tpu_custom_call.1} parent=0
    #allocation2 [shape = 'u8[200704]{0}', space=vmem, size = 0x31000, scoped, tag = 'input window, operand 0, single buffered']
    #allocation3 [shape = 's32[1]{0}', space=sflag, size = 0x4, scoped, tag = 'scoped memory for tpu_custom_call.1']
    #allocation4 [shape = 's32[1]{0}', space=sflag, size = 0x4, scoped, tag = 'scoped memory for tpu_custom_call.1']
    #allocation5 [shape = 'u8[229376]{0}', space=vmem, size = 0x38000, scoped, tag = 'input window, operand 1, single buffered']
    #allocation6 [shape = 's32[1]{0}', space=sflag, size = 0x4, scoped, tag = 'scoped memory for tpu_custom_call.1']
    #allocation7 [shape = 'u8[229376]{0}', space=vmem, size = 0x38000, scoped, tag = 'input window, operand 9, single buffered']
    #allocation8 [shape = 'u8[401408]{0}', space=vmem, size = 0x62000, scoped, tag = 'output window, operand 0, single buffered']
    %16 = vsyncpa [#allocation3], 0
    %17 = vsyncpa [#allocation6], 0
    %18 = vsyncpa [#allocation4], 0
    // Predicated region
    $region2: #{tpu_custom_call.1} parent=1 // pred_check
      _
    $region3: #{tpu_custom_call.1} parent=1 // pred_check_branch
      %20 = sbr.rel (0) target = $region5
    $region4: #{tpu_custom_call.1} parent=1 // pred_region
      %s22 = ssub.s32 6272, 6272
      %23 = vsyncadd [#allocation3], %s22
      %s24 = sshll.u32 [#allocation2], 4
      %s25 = int_to_ptr.vmem [resolvable:$true] %s24
      %30 = dma.hbm_to_vmem [thread:$0]  %s0, 6272, %s25, [#allocation3], 448, 448, 28
    $region5: #{tpu_custom_call.1} parent=1 // pred_fallthru
      _
    // Predicated region
    $region6: #{tpu_custom_call.1} parent=1 // pred_check
      _
    $region7: #{tpu_custom_call.1} parent=1 // pred_check_branch
      %32 = sbr.rel (0) target = $region9
    $region8: #{tpu_custom_call.1} parent=1 // pred_region
      %s34 = ssub.s32 7168, 7168
      %35 = vsyncadd [#allocation6], %s34
      %s36 = sshll.u32 [#allocation5], 4
      %s37 = int_to_ptr.vmem [resolvable:$true] %s36
      %42 = dma.hbm_to_vmem [thread:$0]  %s1, 7168, %s37, [#allocation6], 64, 64, 4
    $region9: #{tpu_custom_call.1} parent=1 // pred_fallthru
      _
    // Predicated region
    $region10: #{tpu_custom_call.1} parent=1 // pred_check
      _
    $region11: #{tpu_custom_call.1} parent=1 // pred_check_branch
      %44 = sbr.rel (0) target = $region13
    $region12: #{tpu_custom_call.1} parent=1 // pred_region
      _
    $region13: #{tpu_custom_call.1} parent=1 // pred_fallthru
      _
    // Predicated region
    $region14: #{tpu_custom_call.1} parent=1 // pred_check
      _
    $region15: #{tpu_custom_call.1} parent=1 // pred_check_branch
      %46 = sbr.rel (0) target = $region17
    $region16: #{tpu_custom_call.1} parent=1 // pred_region
      _
    $region17: #{tpu_custom_call.1} parent=1 // pred_fallthru
      _
    // Predicated region
    $region18: #{tpu_custom_call.1} parent=1 // pred_check
      _
    $region19: #{tpu_custom_call.1} parent=1 // pred_check_branch
      %48 = sbr.rel (0) target = $region21
    $region20: #{tpu_custom_call.1} parent=1 // pred_region
      _
    $region21: #{tpu_custom_call.1} parent=1 // pred_fallthru
      _
    // Predicated region
    $region22: #{tpu_custom_call.1} parent=1 // pred_check
      _
    $region23: #{tpu_custom_call.1} parent=1 // pred_check_branch
      %50 = sbr.rel (0) target = $region25
    $region24: #{tpu_custom_call.1} parent=1 // pred_region
      _
    $region25: #{tpu_custom_call.1} parent=1 // pred_fallthru
      _
    // Predicated region
    $region26: #{tpu_custom_call.1} parent=1 // pred_check
      _
    $region27: #{tpu_custom_call.1} parent=1 // pred_check_branch
      %52 = sbr.rel (0) target = $region29
    $region28: #{tpu_custom_call.1} parent=1 // pred_region
      _
    $region29: #{tpu_custom_call.1} parent=1 // pred_fallthru
      _
    // Predicated region
    $region30: #{tpu_custom_call.1} parent=1 // pred_check
      _
    $region31: #{tpu_custom_call.1} parent=1 // pred_check_branch
      %54 = sbr.rel (0) target = $region33
    $region32: #{tpu_custom_call.1} parent=1 // pred_region
      _
    $region33: #{tpu_custom_call.1} parent=1 // pred_fallthru
      _
    // Predicated region
    $region34: #{tpu_custom_call.1} parent=1 // pred_check
      _
    $region35: #{tpu_custom_call.1} parent=1 // pred_check_branch
      %56 = sbr.rel (0) target = $region37
    $region36: #{tpu_custom_call.1} parent=1 // pred_region
      _
    $region37: #{tpu_custom_call.1} parent=1 // pred_fallthru
      _
    // Predicated region
    $region38: #{tpu_custom_call.1} parent=1 // pred_check
      _
    $region39: #{tpu_custom_call.1} parent=1 // pred_check_branch
      %58 = sbr.rel (0) target = $region41
    $region40: #{tpu_custom_call.1} parent=1 // pred_region
      %s60 = ssub.s32 7168, 7168
      %61 = vsyncadd [#allocation6], %s60
      %s62 = sshll.u32 [#allocation7], 4
      %s63 = int_to_ptr.vmem [resolvable:$true] %s62
      %68 = dma.hbm_to_vmem [thread:$0]  %s9, 7168, %s63, [#allocation6], 448, 448, 28
    $region41: #{tpu_custom_call.1} parent=1 // pred_fallthru
      _
    // Predicated region
    $region42: #{tpu_custom_call.1} parent=1 // pred_check
      _
    $region43: #{tpu_custom_call.1} parent=1 // pred_check_branch
      %70 = sbr.rel (0) target = $region45
    $region44: #{tpu_custom_call.1} parent=1 // pred_region
      _
    $region45: #{tpu_custom_call.1} parent=1 // pred_fallthru
      _
    // Predicated region
    $region46: #{tpu_custom_call.1} parent=1 // pred_check
      _
    $region47: #{tpu_custom_call.1} parent=1 // pred_check_branch
      %72 = sbr.rel (0) target = $region49
    $region48: #{tpu_custom_call.1} parent=1 // pred_region
      %73 = dma.done [#allocation3], 6272
    $region49: #{tpu_custom_call.1} parent=1 // pred_fallthru
      _
    // Predicated region
    $region50: #{tpu_custom_call.1} parent=1 // pred_check
      _
    $region51: #{tpu_custom_call.1} parent=1 // pred_check_branch
      %75 = sbr.rel (0) target = $region53
    $region52: #{tpu_custom_call.1} parent=1 // pred_region
      %76 = dma.done [#allocation6], 7168
    $region53: #{tpu_custom_call.1} parent=1 // pred_fallthru
      _
    // Predicated region
    $region54: #{tpu_custom_call.1} parent=1 // pred_check
      _
    $region55: #{tpu_custom_call.1} parent=1 // pred_check_branch
      %78 = sbr.rel (0) target = $region57
    $region56: #{tpu_custom_call.1} parent=1 // pred_region
      %79 = dma.done [#allocation6], 7168
    $region57: #{tpu_custom_call.1} parent=1 // pred_fallthru
      _
    %v81 = vld [vmem:[#allocation2] sm:$0xff]
    %v82 = vld [vmem:[#allocation2 + $0x8] sm:$0xff]
    %v83 = vld [vmem:[#allocation2 + $0x10] sm:$0xff]
    %v84 = vld [vmem:[#allocation2 + $0x18] sm:$0xf]
    %v85 = vld [vmem:[#allocation2 + $0x1c] sm:$0xff]
    %v86 = vld [vmem:[#allocation2 + $0x24] sm:$0xff]
    %v87 = vld [vmem:[#allocation2 + $0x2c] sm:$0xff]
    %v88 = vld [vmem:[#allocation2 + $0x34] sm:$0xf]
    %v89 = vld [vmem:[#allocation2 + $0x38] sm:$0xff]
    %v90 = vld [vmem:[#allocation2 + $0x40] sm:$0xff]
    %v91 = vld [vmem:[#allocation2 + $0x48] sm:$0xff]
    %v92 = vld [vmem:[#allocation2 + $0x50] sm:$0xf]
    %v93 = vld [vmem:[#allocation2 + $0x54] sm:$0xff]
    %v94 = vld [vmem:[#allocation2 + $0x5c] sm:$0xff]
    %v95 = vld [vmem:[#allocation2 + $0x64] sm:$0xff]
    %v96 = vld [vmem:[#allocation2 + $0x6c] sm:$0xf]
    %v97 = vld [vmem:[#allocation2 + $0x70] sm:$0xff]
    %v98 = vld [vmem:[#allocation2 + $0x78] sm:$0xff]
    %v99 = vld [vmem:[#allocation2 + $0x80] sm:$0xff]
    %v100 = vld [vmem:[#allocation2 + $0x88] sm:$0xf]
    %v101 = vld [vmem:[#allocation2 + $0x8c] sm:$0xff]
    %v102 = vld [vmem:[#allocation2 + $0x94] sm:$0xff]
    %v103 = vld [vmem:[#allocation2 + $0x9c] sm:$0xff]
    %v104 = vld [vmem:[#allocation2 + $0xa4] sm:$0xf]
    %v105 = vld [vmem:[#allocation2 + $0xa8] sm:$0xff]
    %v106 = vld [vmem:[#allocation2 + $0xb0] sm:$0xff]
    %v107 = vld [vmem:[#allocation2 + $0xb8] sm:$0xff]
    %v108 = vld [vmem:[#allocation2 + $0xc0] sm:$0xf]
    %v109 = vld [vmem:[#allocation2 + $0xc4] sm:$0xff]
    %v110 = vld [vmem:[#allocation2 + $0xcc] sm:$0xff]
    %v111 = vld [vmem:[#allocation2 + $0xd4] sm:$0xff]
    %v112 = vld [vmem:[#allocation2 + $0xdc] sm:$0xf]
    %v113 = vld [vmem:[#allocation2 + $0xe0] sm:$0xff]
    %v114 = vld [vmem:[#allocation2 + $0xe8] sm:$0xff]
    %v115 = vld [vmem:[#allocation2 + $0xf0] sm:$0xff]
    %v116 = vld [vmem:[#allocation2 + $0xf8] sm:$0xf]
    %v117 = vld [vmem:[#allocation2 + $0xfc] sm:$0xff]
    %v118 = vld [vmem:[#allocation2 + $0x104] sm:$0xff]
    %v119 = vld [vmem:[#allocation2 + $0x10c] sm:$0xff]
    %v120 = vld [vmem:[#allocation2 + $0x114] sm:$0xf]
    %v121 = vld [vmem:[#allocation2 + $0x118] sm:$0xff]
    %v122 = vld [vmem:[#allocation2 + $0x120] sm:$0xff]
    %v123 = vld [vmem:[#allocation2 + $0x128] sm:$0xff]
    %v124 = vld [vmem:[#allocation2 + $0x130] sm:$0xf]
    %v125 = vld [vmem:[#allocation2 + $0x134] sm:$0xff]
    %v126 = vld [vmem:[#allocation2 + $0x13c] sm:$0xff]
    %v127 = vld [vmem:[#allocation2 + $0x144] sm:$0xff]
    %v128 = vld [vmem:[#allocation2 + $0x14c] sm:$0xf]
    %v129 = vld [vmem:[#allocation2 + $0x150] sm:$0xff]
    %v130 = vld [vmem:[#allocation2 + $0x158] sm:$0xff]
    %v131 = vld [vmem:[#allocation2 + $0x160] sm:$0xff]
    %v132 = vld [vmem:[#allocation2 + $0x168] sm:$0xf]
    %v133 = vld [vmem:[#allocation2 + $0x16c] sm:$0xff]
    %v134 = vld [vmem:[#allocation2 + $0x174] sm:$0xff]
    %v135 = vld [vmem:[#allocation2 + $0x17c] sm:$0xff]
    %v136 = vld [vmem:[#allocation2 + $0x184] sm:$0xf]
    %v137 = vld [vmem:[#allocation5] sm:$0xf]
    %v138 = vld [vmem:[#allocation5 + $0x4] sm:$0xf]
    %v139 = vld [vmem:[#allocation5 + $0x8] sm:$0xf]
    %v140 = vld [vmem:[#allocation5 + $0xc] sm:$0xf]
    %v141 = vld [vmem:[#allocation5 + $0x10] sm:$0xf]
    %v142 = vld [vmem:[#allocation5 + $0x14] sm:$0xf]
    %v143 = vld [vmem:[#allocation5 + $0x18] sm:$0xf]
    %v144 = vld [vmem:[#allocation5 + $0x1c] sm:$0xf]
    %v145 = vld [vmem:[#allocation5 + $0x20] sm:$0xf]
    %v146 = vld [vmem:[#allocation5 + $0x24] sm:$0xf]
    %v147 = vld [vmem:[#allocation5 + $0x28] sm:$0xf]
    %v148 = vld [vmem:[#allocation5 + $0x2c] sm:$0xf]
    %v149 = vld [vmem:[#allocation5 + $0x30] sm:$0xf]
    %v150 = vld [vmem:[#allocation5 + $0x34] sm:$0xf]
    %v151 = vld [vmem:[#allocation5 + $0x38] sm:$0xf]
    %v152 = vld [vmem:[#allocation5 + $0x3c] sm:$0xf]
    %v153 = vld [vmem:[#allocation5 + $0x40] sm:$0xf]
    %v154 = vld [vmem:[#allocation5 + $0x44] sm:$0xf]
    %v155 = vld [vmem:[#allocation5 + $0x48] sm:$0xf]
    %v156 = vld [vmem:[#allocation5 + $0x4c] sm:$0xf]
    %v157 = vld [vmem:[#allocation5 + $0x50] sm:$0xf]
    %v158 = vld [vmem:[#allocation5 + $0x54] sm:$0xf]
    %v159 = vld [vmem:[#allocation5 + $0x58] sm:$0xf]
    %v160 = vld [vmem:[#allocation5 + $0x5c] sm:$0xf]
    %v161 = vld [vmem:[#allocation5 + $0x60] sm:$0xf]
    %v162 = vld [vmem:[#allocation5 + $0x64] sm:$0xf]
    %v163 = vld [vmem:[#allocation5 + $0x68] sm:$0xf]
    %v164 = vld [vmem:[#allocation5 + $0x6c] sm:$0xf]
    %v165 = vld [vmem:[#allocation5 + $0x70] sm:$0xf]
    %v166 = vld [vmem:[#allocation5 + $0x74] sm:$0xf]
    %v167 = vld [vmem:[#allocation5 + $0x78] sm:$0xf]
    %v168 = vld [vmem:[#allocation5 + $0x7c] sm:$0xf]
    %v169 = vld [vmem:[#allocation5 + $0x80] sm:$0xf]
    %v170 = vld [vmem:[#allocation5 + $0x84] sm:$0xf]
    %v171 = vld [vmem:[#allocation5 + $0x88] sm:$0xf]
    %v172 = vld [vmem:[#allocation5 + $0x8c] sm:$0xf]
    %v173 = vld [vmem:[#allocation5 + $0x90] sm:$0xf]
    %v174 = vld [vmem:[#allocation5 + $0x94] sm:$0xf]
    %v175 = vld [vmem:[#allocation5 + $0x98] sm:$0xf]
    %v176 = vld [vmem:[#allocation5 + $0x9c] sm:$0xf]
    %v177 = vld [vmem:[#allocation5 + $0xa0] sm:$0xf]
    %v178 = vld [vmem:[#allocation5 + $0xa4] sm:$0xf]
    %v179 = vld [vmem:[#allocation5 + $0xa8] sm:$0xf]
    %v180 = vld [vmem:[#allocation5 + $0xac] sm:$0xf]
    %v181 = vld [vmem:[#allocation5 + $0xb0] sm:$0xf]
    %v182 = vld [vmem:[#allocation5 + $0xb4] sm:$0xf]
    %v183 = vld [vmem:[#allocation5 + $0xb8] sm:$0xf]
    %v184 = vld [vmem:[#allocation5 + $0xbc] sm:$0xf]
    %v185 = vld [vmem:[#allocation5 + $0xc0] sm:$0xf]
    %v186 = vld [vmem:[#allocation5 + $0xc4] sm:$0xf]
    %v187 = vld [vmem:[#allocation5 + $0xc8] sm:$0xf]
    %v188 = vld [vmem:[#allocation5 + $0xcc] sm:$0xf]
    %v189 = vld [vmem:[#allocation5 + $0xd0] sm:$0xf]
    %v190 = vld [vmem:[#allocation5 + $0xd4] sm:$0xf]
    %v191 = vld [vmem:[#allocation5 + $0xd8] sm:$0xf]
    %v192 = vld [vmem:[#allocation5 + $0xdc] sm:$0xf]
    %v193 = vld [vmem:[#allocation5 + $0xe0] sm:$0xf]
    %v194 = vld [vmem:[#allocation5 + $0xe4] sm:$0xf]
    %v195 = vld [vmem:[#allocation5 + $0xe8] sm:$0xf]
    %v196 = vld [vmem:[#allocation5 + $0xec] sm:$0xf]
    %v197 = vld [vmem:[#allocation5 + $0xf0] sm:$0xf]
    %v198 = vld [vmem:[#allocation5 + $0xf4] sm:$0xf]
    %v199 = vld [vmem:[#allocation5 + $0xf8] sm:$0xf]
    %v200 = vld [vmem:[#allocation5 + $0xfc] sm:$0xf]
    %v201 = vld [vmem:[#allocation5 + $0x100] sm:$0xf]
    %v202 = vld [vmem:[#allocation5 + $0x104] sm:$0xf]
    %v203 = vld [vmem:[#allocation5 + $0x108] sm:$0xf]
    %v204 = vld [vmem:[#allocation5 + $0x10c] sm:$0xf]
    %v205 = vld [vmem:[#allocation5 + $0x110] sm:$0xf]
    %v206 = vld [vmem:[#allocation5 + $0x114] sm:$0xf]
    %v207 = vld [vmem:[#allocation5 + $0x118] sm:$0xf]
    %v208 = vld [vmem:[#allocation5 + $0x11c] sm:$0xf]
    %v209 = vld [vmem:[#allocation5 + $0x120] sm:$0xf]
    %v210 = vld [vmem:[#allocation5 + $0x124] sm:$0xf]
    %v211 = vld [vmem:[#allocation5 + $0x128] sm:$0xf]
    %v212 = vld [vmem:[#allocation5 + $0x12c] sm:$0xf]
    %v213 = vld [vmem:[#allocation5 + $0x130] sm:$0xf]
    %v214 = vld [vmem:[#allocation5 + $0x134] sm:$0xf]
    %v215 = vld [vmem:[#allocation5 + $0x138] sm:$0xf]
    %v216 = vld [vmem:[#allocation5 + $0x13c] sm:$0xf]
    %v217 = vld [vmem:[#allocation5 + $0x140] sm:$0xf]
    %v218 = vld [vmem:[#allocation5 + $0x144] sm:$0xf]
    %v219 = vld [vmem:[#allocation5 + $0x148] sm:$0xf]
    %v220 = vld [vmem:[#allocation5 + $0x14c] sm:$0xf]
    %v221 = vld [vmem:[#allocation5 + $0x150] sm:$0xf]
    %v222 = vld [vmem:[#allocation5 + $0x154] sm:$0xf]
    %v223 = vld [vmem:[#allocation5 + $0x158] sm:$0xf]
    %v224 = vld [vmem:[#allocation5 + $0x15c] sm:$0xf]
    %v225 = vld [vmem:[#allocation5 + $0x160] sm:$0xf]
    %v226 = vld [vmem:[#allocation5 + $0x164] sm:$0xf]
    %v227 = vld [vmem:[#allocation5 + $0x168] sm:$0xf]
    %v228 = vld [vmem:[#allocation5 + $0x16c] sm:$0xf]
    %v229 = vld [vmem:[#allocation5 + $0x170] sm:$0xf]
    %v230 = vld [vmem:[#allocation5 + $0x174] sm:$0xf]
    %v231 = vld [vmem:[#allocation5 + $0x178] sm:$0xf]
    %v232 = vld [vmem:[#allocation5 + $0x17c] sm:$0xf]
    %v233 = vld [vmem:[#allocation5 + $0x180] sm:$0xf]
    %v234 = vld [vmem:[#allocation5 + $0x184] sm:$0xf]
    %v235 = vld [vmem:[#allocation5 + $0x188] sm:$0xf]
    %v236 = vld [vmem:[#allocation5 + $0x18c] sm:$0xf]
    %v237 = vld [vmem:[#allocation5 + $0x190] sm:$0xf]
    %v238 = vld [vmem:[#allocation5 + $0x194] sm:$0xf]
    %v239 = vld [vmem:[#allocation5 + $0x198] sm:$0xf]
    %v240 = vld [vmem:[#allocation5 + $0x19c] sm:$0xf]
    %v241 = vld [vmem:[#allocation5 + $0x1a0] sm:$0xf]
    %v242 = vld [vmem:[#allocation5 + $0x1a4] sm:$0xf]
    %v243 = vld [vmem:[#allocation5 + $0x1a8] sm:$0xf]
    %v244 = vld [vmem:[#allocation5 + $0x1ac] sm:$0xf]
    %v245 = vld [vmem:[#allocation5 + $0x1b0] sm:$0xf]
    %v246 = vld [vmem:[#allocation5 + $0x1b4] sm:$0xf]
    %v247 = vld [vmem:[#allocation5 + $0x1b8] sm:$0xf]
    %v248 = vld [vmem:[#allocation5 + $0x1bc] sm:$0xf]
    %v249 = vld [vmem:[%s2] sm:$0x1]
    %v251 = vlaneseq
    %v252 = vshrl.u32 %v251, 7
    %v253 = vsub.s32 0, %v252
    %v254 = vrot.slane %v249, %v253
    %v312 = vunpack.c.l.b16 %v81
    %v313 = vunpack.c.h.b16 %v81
    %v314 = vunpack.c.l.b16 %v82
    %v315 = vunpack.c.h.b16 %v82
    %v316 = vunpack.c.l.b16 %v83
    %v317 = vunpack.c.h.b16 %v83
    %v318 = vunpack.c.l.b16 %v84
    %v319 = vunpack.c.l.b16 %v85
    %v320 = vunpack.c.h.b16 %v85
    %v321 = vunpack.c.l.b16 %v86
    %v322 = vunpack.c.h.b16 %v86
    %v323 = vunpack.c.l.b16 %v87
    %v324 = vunpack.c.h.b16 %v87
    %v325 = vunpack.c.l.b16 %v88
    %v326 = vunpack.c.l.b16 %v89
    %v327 = vunpack.c.h.b16 %v89
    %v328 = vunpack.c.l.b16 %v90
    %v329 = vunpack.c.h.b16 %v90
    %v330 = vunpack.c.l.b16 %v91
    %v331 = vunpack.c.h.b16 %v91
    %v332 = vunpack.c.l.b16 %v92
    %v333 = vunpack.c.l.b16 %v93
    %v334 = vunpack.c.h.b16 %v93
    %v335 = vunpack.c.l.b16 %v94
    %v336 = vunpack.c.h.b16 %v94
    %v337 = vunpack.c.l.b16 %v95
    %v338 = vunpack.c.h.b16 %v95
    %v339 = vunpack.c.l.b16 %v96
    %v340 = vunpack.c.l.b16 %v97
    %v341 = vunpack.c.h.b16 %v97
    %v342 = vunpack.c.l.b16 %v98
    %v343 = vunpack.c.h.b16 %v98
    %v344 = vunpack.c.l.b16 %v99
    %v345 = vunpack.c.h.b16 %v99
    %v346 = vunpack.c.l.b16 %v100
    %v347 = vunpack.c.l.b16 %v101
    %v348 = vunpack.c.h.b16 %v101
    %v349 = vunpack.c.l.b16 %v102
    %v350 = vunpack.c.h.b16 %v102
    %v351 = vunpack.c.l.b16 %v103
    %v352 = vunpack.c.h.b16 %v103
    %v353 = vunpack.c.l.b16 %v104
    %v354 = vunpack.c.l.b16 %v105
    %v355 = vunpack.c.h.b16 %v105
    %v356 = vunpack.c.l.b16 %v106
    %v357 = vunpack.c.h.b16 %v106
    %v358 = vunpack.c.l.b16 %v107
    %v359 = vunpack.c.h.b16 %v107
    %v360 = vunpack.c.l.b16 %v108
    %v361 = vunpack.c.l.b16 %v109
    %v362 = vunpack.c.h.b16 %v109
    %v363 = vunpack.c.l.b16 %v110
    %v364 = vunpack.c.h.b16 %v110
    %v365 = vunpack.c.l.b16 %v111
    %v366 = vunpack.c.h.b16 %v111
    %v367 = vunpack.c.l.b16 %v112
    %v368 = vunpack.c.l.b16 %v113
    %v369 = vunpack.c.h.b16 %v113
    %v370 = vunpack.c.l.b16 %v114
    %v371 = vunpack.c.h.b16 %v114
    %v372 = vunpack.c.l.b16 %v115
    %v373 = vunpack.c.h.b16 %v115
    %v374 = vunpack.c.l.b16 %v116
    %v375 = vunpack.c.l.b16 %v117
    %v376 = vunpack.c.h.b16 %v117
    %v377 = vunpack.c.l.b16 %v118
    %v378 = vunpack.c.h.b16 %v118
    %v379 = vunpack.c.l.b16 %v119
    %v380 = vunpack.c.h.b16 %v119
    %v381 = vunpack.c.l.b16 %v120
    %v382 = vunpack.c.l.b16 %v121
    %v383 = vunpack.c.h.b16 %v121
    %v384 = vunpack.c.l.b16 %v122
    %v385 = vunpack.c.h.b16 %v122
    %v386 = vunpack.c.l.b16 %v123
    %v387 = vunpack.c.h.b16 %v123
    %v388 = vunpack.c.l.b16 %v124
    %v389 = vunpack.c.l.b16 %v125
    %v390 = vunpack.c.h.b16 %v125
    %v391 = vunpack.c.l.b16 %v126
    %v392 = vunpack.c.h.b16 %v126
    %v393 = vunpack.c.l.b16 %v127
    %v394 = vunpack.c.h.b16 %v127
    %v395 = vunpack.c.l.b16 %v128
    %v396 = vunpack.c.l.b16 %v129
    %v397 = vunpack.c.h.b16 %v129
    %v398 = vunpack.c.l.b16 %v130
    %v399 = vunpack.c.h.b16 %v130
    %v400 = vunpack.c.l.b16 %v131
    %v401 = vunpack.c.h.b16 %v131
    %v402 = vunpack.c.l.b16 %v132
    %v403 = vunpack.c.l.b16 %v133
    %v404 = vunpack.c.h.b16 %v133
    %v405 = vunpack.c.l.b16 %v134
    %v406 = vunpack.c.h.b16 %v134
    %v407 = vunpack.c.l.b16 %v135
    %v408 = vunpack.c.h.b16 %v135
    %v409 = vunpack.c.l.b16 %v136
    %v410 = vpack.c.b16 %v319, %v312
    %v411 = vpack.c.b16 %v320, %v313
    %v412 = vpack.c.b16 %v321, %v314
    %v413 = vpack.c.b16 %v322, %v315
    %v414 = vpack.c.b16 %v323, %v316
    %v415 = vpack.c.b16 %v324, %v317
    %v416 = vpack.c.b16 %v325, %v318
    %v417 = vpack.c.b16 %v333, %v326
    %v418 = vpack.c.b16 %v334, %v327
    %v419 = vpack.c.b16 %v335, %v328
    %v420 = vpack.c.b16 %v336, %v329
    %v421 = vpack.c.b16 %v337, %v330
    %v422 = vpack.c.b16 %v338, %v331
    %v423 = vpack.c.b16 %v339, %v332
    %v424 = vpack.c.b16 %v347, %v340
    %v425 = vpack.c.b16 %v348, %v341
    %v426 = vpack.c.b16 %v349, %v342
    %v427 = vpack.c.b16 %v350, %v343
    %v428 = vpack.c.b16 %v351, %v344
    %v429 = vpack.c.b16 %v352, %v345
    %v430 = vpack.c.b16 %v353, %v346
    %v431 = vpack.c.b16 %v361, %v354
    %v432 = vpack.c.b16 %v362, %v355
    %v433 = vpack.c.b16 %v363, %v356
    %v434 = vpack.c.b16 %v364, %v357
    %v435 = vpack.c.b16 %v365, %v358
    %v436 = vpack.c.b16 %v366, %v359
    %v437 = vpack.c.b16 %v367, %v360
    %v438 = vpack.c.b16 %v375, %v368
    %v439 = vpack.c.b16 %v376, %v369
    %v440 = vpack.c.b16 %v377, %v370
    %v441 = vpack.c.b16 %v378, %v371
    %v442 = vpack.c.b16 %v379, %v372
    %v443 = vpack.c.b16 %v380, %v373
    %v444 = vpack.c.b16 %v381, %v374
    %v445 = vpack.c.b16 %v389, %v382
    %v446 = vpack.c.b16 %v390, %v383
    %v447 = vpack.c.b16 %v391, %v384
    %v448 = vpack.c.b16 %v392, %v385
    %v449 = vpack.c.b16 %v393, %v386
    %v450 = vpack.c.b16 %v394, %v387
    %v451 = vpack.c.b16 %v395, %v388
    %v452 = vpack.c.b16 %v403, %v396
    %v453 = vpack.c.b16 %v404, %v397
    %v454 = vpack.c.b16 %v405, %v398
    %v455 = vpack.c.b16 %v406, %v399
    %v456 = vpack.c.b16 %v407, %v400
    %v457 = vpack.c.b16 %v408, %v401
    %v458 = vpack.c.b16 %v409, %v402
    %v620 = vunpack.c.l.b16 %v137
    %v621 = vunpack.c.l.b16 %v138
    %v622 = vunpack.c.l.b16 %v139
    %v623 = vunpack.c.l.b16 %v140
    %v624 = vunpack.c.l.b16 %v141
    %v625 = vunpack.c.l.b16 %v142
    %v626 = vunpack.c.l.b16 %v143
    %v627 = vunpack.c.l.b16 %v144
    %v628 = vunpack.c.l.b16 %v145
    %v629 = vunpack.c.l.b16 %v146
    %v630 = vunpack.c.l.b16 %v147
    %v631 = vunpack.c.l.b16 %v148
    %v632 = vunpack.c.l.b16 %v149
    %v633 = vunpack.c.l.b16 %v150
    %v634 = vunpack.c.l.b16 %v151
    %v635 = vunpack.c.l.b16 %v152
    %v636 = vunpack.c.l.b16 %v153
    %v637 = vunpack.c.l.b16 %v154
    %v638 = vunpack.c.l.b16 %v155
    %v639 = vunpack.c.l.b16 %v156
    %v640 = vunpack.c.l.b16 %v157
    %v641 = vunpack.c.l.b16 %v158
    %v642 = vunpack.c.l.b16 %v159
    %v643 = vunpack.c.l.b16 %v160
    %v644 = vunpack.c.l.b16 %v161
    %v645 = vunpack.c.l.b16 %v162
    %v646 = vunpack.c.l.b16 %v163
    %v647 = vunpack.c.l.b16 %v164
    %v648 = vunpack.c.l.b16 %v165
    %v649 = vunpack.c.l.b16 %v166
    %v650 = vunpack.c.l.b16 %v167
    %v651 = vunpack.c.l.b16 %v168
    %v652 = vunpack.c.l.b16 %v169
    %v653 = vunpack.c.l.b16 %v170
    %v654 = vunpack.c.l.b16 %v171
    %v655 = vunpack.c.l.b16 %v172
    %v656 = vunpack.c.l.b16 %v173
    %v657 = vunpack.c.l.b16 %v174
    %v658 = vunpack.c.l.b16 %v175
    %v659 = vunpack.c.l.b16 %v176
    %v660 = vunpack.c.l.b16 %v177
    %v661 = vunpack.c.l.b16 %v178
    %v662 = vunpack.c.l.b16 %v179
    %v663 = vunpack.c.l.b16 %v180
    %v664 = vunpack.c.l.b16 %v181
    %v665 = vunpack.c.l.b16 %v182
    %v666 = vunpack.c.l.b16 %v183
    %v667 = vunpack.c.l.b16 %v184
    %v668 = vunpack.c.l.b16 %v185
    %v669 = vunpack.c.l.b16 %v186
    %v670 = vunpack.c.l.b16 %v187
    %v671 = vunpack.c.l.b16 %v188
    %v672 = vunpack.c.l.b16 %v189
    %v673 = vunpack.c.l.b16 %v190
    %v674 = vunpack.c.l.b16 %v191
    %v675 = vunpack.c.l.b16 %v192
    %v676 = vunpack.c.l.b16 %v193
    %v677 = vunpack.c.l.b16 %v194
    %v678 = vunpack.c.l.b16 %v195
    %v679 = vunpack.c.l.b16 %v196
    %v680 = vunpack.c.l.b16 %v197
    %v681 = vunpack.c.l.b16 %v198
    %v682 = vunpack.c.l.b16 %v199
    %v683 = vunpack.c.l.b16 %v200
    %v684 = vunpack.c.l.b16 %v201
    %v685 = vunpack.c.l.b16 %v202
    %v686 = vunpack.c.l.b16 %v203
    %v687 = vunpack.c.l.b16 %v204
    %v688 = vunpack.c.l.b16 %v205
    %v689 = vunpack.c.l.b16 %v206
    %v690 = vunpack.c.l.b16 %v207
    %v691 = vunpack.c.l.b16 %v208
    %v692 = vunpack.c.l.b16 %v209
    %v693 = vunpack.c.l.b16 %v210
    %v694 = vunpack.c.l.b16 %v211
    %v695 = vunpack.c.l.b16 %v212
    %v696 = vunpack.c.l.b16 %v213
    %v697 = vunpack.c.l.b16 %v214
    %v698 = vunpack.c.l.b16 %v215
    %v699 = vunpack.c.l.b16 %v216
    %v700 = vunpack.c.l.b16 %v217
    %v701 = vunpack.c.l.b16 %v218
    %v702 = vunpack.c.l.b16 %v219
    %v703 = vunpack.c.l.b16 %v220
    %v704 = vunpack.c.l.b16 %v221
    %v705 = vunpack.c.l.b16 %v222
    %v706 = vunpack.c.l.b16 %v223
    %v707 = vunpack.c.l.b16 %v224
    %v708 = vunpack.c.l.b16 %v225
    %v709 = vunpack.c.l.b16 %v226
    %v710 = vunpack.c.l.b16 %v227
    %v711 = vunpack.c.l.b16 %v228
    %v712 = vunpack.c.l.b16 %v229
    %v713 = vunpack.c.l.b16 %v230
    %v714 = vunpack.c.l.b16 %v231
    %v715 = vunpack.c.l.b16 %v232
    %v716 = vunpack.c.l.b16 %v233
    %v717 = vunpack.c.l.b16 %v234
    %v718 = vunpack.c.l.b16 %v235
    %v719 = vunpack.c.l.b16 %v236
    %v720 = vunpack.c.l.b16 %v237
    %v721 = vunpack.c.l.b16 %v238
    %v722 = vunpack.c.l.b16 %v239
    %v723 = vunpack.c.l.b16 %v240
    %v724 = vunpack.c.l.b16 %v241
    %v725 = vunpack.c.l.b16 %v242
    %v726 = vunpack.c.l.b16 %v243
    %v727 = vunpack.c.l.b16 %v244
    %v728 = vunpack.c.l.b16 %v245
    %v729 = vunpack.c.l.b16 %v246
    %v730 = vunpack.c.l.b16 %v247
    %v731 = vunpack.c.l.b16 %v248
    %v732 = vpack.c.b16 %v621, %v620
    %v733 = vpack.c.b16 %v623, %v622
    %v734 = vpack.c.b16 %v625, %v624
    %v735 = vpack.c.b16 %v627, %v626
    %v736 = vpack.c.b16 %v629, %v628
    %v737 = vpack.c.b16 %v631, %v630
    %v738 = vpack.c.b16 %v633, %v632
    %v739 = vpack.c.b16 %v635, %v634
    %v740 = vpack.c.b16 %v637, %v636
    %v741 = vpack.c.b16 %v639, %v638
    %v742 = vpack.c.b16 %v641, %v640
    %v743 = vpack.c.b16 %v643, %v642
    %v744 = vpack.c.b16 %v645, %v644
    %v745 = vpack.c.b16 %v647, %v646
    %v746 = vpack.c.b16 %v649, %v648
    %v747 = vpack.c.b16 %v651, %v650
    %v748 = vpack.c.b16 %v653, %v652
    %v749 = vpack.c.b16 %v655, %v654
    %v750 = vpack.c.b16 %v657, %v656
    %v751 = vpack.c.b16 %v659, %v658
    %v752 = vpack.c.b16 %v661, %v660
    %v753 = vpack.c.b16 %v663, %v662
    %v754 = vpack.c.b16 %v665, %v664
    %v755 = vpack.c.b16 %v667, %v666
    %v756 = vpack.c.b16 %v669, %v668
    %v757 = vpack.c.b16 %v671, %v670
    %v758 = vpack.c.b16 %v673, %v672
    %v759 = vpack.c.b16 %v675, %v674
    %v760 = vpack.c.b16 %v677, %v676
    %v761 = vpack.c.b16 %v679, %v678
    %v762 = vpack.c.b16 %v681, %v680
    %v763 = vpack.c.b16 %v683, %v682
    %v764 = vpack.c.b16 %v685, %v684
    %v765 = vpack.c.b16 %v687, %v686
    %v766 = vpack.c.b16 %v689, %v688
    %v767 = vpack.c.b16 %v691, %v690
    %v768 = vpack.c.b16 %v693, %v692
    %v769 = vpack.c.b16 %v695, %v694
    %v770 = vpack.c.b16 %v697, %v696
    %v771 = vpack.c.b16 %v699, %v698
    %v772 = vpack.c.b16 %v701, %v700
    %v773 = vpack.c.b16 %v703, %v702
    %v774 = vpack.c.b16 %v705, %v704
    %v775 = vpack.c.b16 %v707, %v706
    %v776 = vpack.c.b16 %v709, %v708
    %v777 = vpack.c.b16 %v711, %v710
    %v778 = vpack.c.b16 %v713, %v712
    %v779 = vpack.c.b16 %v715, %v714
    %v780 = vpack.c.b16 %v717, %v716
    %v781 = vpack.c.b16 %v719, %v718
    %v782 = vpack.c.b16 %v721, %v720
    %v783 = vpack.c.b16 %v723, %v722
    %v784 = vpack.c.b16 %v725, %v724
    %v785 = vpack.c.b16 %v727, %v726
    %v786 = vpack.c.b16 %v729, %v728
    %v787 = vpack.c.b16 %v731, %v730
    %844 = vmatprep.subr.bf16.mxu0 0
    %845 = vmatpush1.bf16.msra.mxu0 %v732
    %846 = vmatprep.subr.bf16.mxu0 0
    %847 = vmatpush1.bf16.msra.mxu0 %v733
    %848 = vmatprep.subr.bf16.mxu0 0
    %849 = vmatpush1.bf16.msra.mxu0 %v734
    %850 = vmatprep.subr.bf16.mxu0 0
    %851 = vmatpush1.bf16.msra.mxu0 %v735
    %852 = vmatprep.subr.bf16.mxu0 0
    %853 = vmatpush1.bf16.msra.mxu0 %v736
    %854 = vmatprep.subr.bf16.mxu0 0
    %855 = vmatpush1.bf16.msra.mxu0 %v737
    %856 = vmatprep.subr.bf16.mxu0 0
    %857 = vmatpush1.bf16.msra.mxu0 %v738
    %858 = vmatprep.subr.bf16.mxu0 0
    %859 = vmatpush1.bf16.msra.mxu0 %v739
    %860 = vmatprep.subr.bf16.mxu0 0
    %861 = vmatpush1.bf16.msra.mxu0 %v740
    %862 = vmatprep.subr.bf16.mxu0 0
    %863 = vmatpush1.bf16.msra.mxu0 %v741
    %864 = vmatprep.subr.bf16.mxu0 0
    %865 = vmatpush1.bf16.msra.mxu0 %v742
    %866 = vmatprep.subr.bf16.mxu0 0
    %867 = vmatpush1.bf16.msra.mxu0 %v743
    %868 = vmatprep.subr.bf16.mxu0 0
    %869 = vmatpush1.bf16.msra.mxu0 %v744
    %870 = vmatprep.subr.bf16.mxu0 0
    %871 = vmatpush1.bf16.msra.mxu0 %v745
    %872 = vmatprep.subr.bf16.mxu0 0
    %873 = vmatpush1.bf16.msra.mxu0 %v746
    %874 = vmatprep.subr.bf16.mxu0 0
    %875 = vmatpush1.bf16.msra.mxu0 %v747
    %876 = vmatprep.mubr.bf16.mxu0 %v411
    %877 = vmatmul.mubr.bf16.gmra.mrb[0].mxu0 %v410
    %v878 = vpop.f32.mrb[0].mxu0
    %v879 = vadd.f32 %v254, %v878
    %v880 = vpop.f32.mrb[0].mxu0
    %v881 = vpop.f32.mrb[0].mxu0
    %v882 = vadd.f32 %v254, %v881
    %v883 = vpop.f32.mrb[0].mxu0
    %884 = vmatprep.mubr.bf16.mxu0 %v418
    %885 = vmatmul.mubr.bf16.gmra.mrb[0].mxu0 %v417
    %v886 = vpop.f32.mrb[0].mxu0
    %v887 = vadd.f32 %v254, %v886
    %v888 = vpop.f32.mrb[0].mxu0
    %v889 = vpop.f32.mrb[0].mxu0
    %v890 = vadd.f32 %v254, %v889
    %v891 = vpop.f32.mrb[0].mxu0
    %892 = vmatprep.mubr.bf16.mxu0 %v425
    %893 = vmatmul.mubr.bf16.gmra.mrb[0].mxu0 %v424
    %v894 = vpop.f32.mrb[0].mxu0
    %v895 = vadd.f32 %v254, %v894
    %v896 = vpop.f32.mrb[0].mxu0
    %v897 = vpop.f32.mrb[0].mxu0
    %v898 = vadd.f32 %v254, %v897
    %v899 = vpop.f32.mrb[0].mxu0
    %900 = vmatprep.mubr.bf16.mxu0 %v432
    %901 = vmatmul.mubr.bf16.gmra.mrb[0].mxu0 %v431
    %v902 = vpop.f32.mrb[0].mxu0
    %v903 = vadd.f32 %v254, %v902
    %v904 = vpop.f32.mrb[0].mxu0
    %v905 = vpop.f32.mrb[0].mxu0
    %v906 = vadd.f32 %v254, %v905
    %v907 = vpop.f32.mrb[0].mxu0
    %908 = vmatprep.mubr.bf16.mxu0 %v439
    %909 = vmatmul.mubr.bf16.gmra.mrb[0].mxu0 %v438
    %v910 = vpop.f32.mrb[0].mxu0
    %v911 = vadd.f32 %v254, %v910
    %v912 = vpop.f32.mrb[0].mxu0
    %v913 = vpop.f32.mrb[0].mxu0
    %v914 = vadd.f32 %v254, %v913
    %v915 = vpop.f32.mrb[0].mxu0
    %916 = vmatprep.mubr.bf16.mxu0 %v446
    %917 = vmatmul.mubr.bf16.gmra.mrb[0].mxu0 %v445
    %v918 = vpop.f32.mrb[0].mxu0
    %v919 = vadd.f32 %v254, %v918
    %v920 = vpop.f32.mrb[0].mxu0
    %v921 = vpop.f32.mrb[0].mxu0
    %v922 = vadd.f32 %v254, %v921
    %v923 = vpop.f32.mrb[0].mxu0
    %924 = vmatprep.mubr.bf16.mxu0 %v453
    %925 = vmatmul.mubr.bf16.gmra.mrb[0].mxu0 %v452
    %v926 = vpop.f32.mrb[0].mxu0
    %v927 = vadd.f32 %v254, %v926
    %v928 = vpop.f32.mrb[0].mxu0
    %v929 = vpop.f32.mrb[0].mxu0
    %v930 = vadd.f32 %v254, %v929
    %v931 = vpop.f32.mrb[0].mxu0
    %932 = vdwg.mxu0
    %933 = vmatprep.subr.bf16.mxu0 0
    %934 = vmatpush1.bf16.msra.mxu0 %v748
    %935 = vmatprep.subr.bf16.mxu0 0
    %936 = vmatpush1.bf16.msra.mxu0 %v749
    %937 = vmatprep.subr.bf16.mxu0 0
    %938 = vmatpush1.bf16.msra.mxu0 %v750
    %939 = vmatprep.subr.bf16.mxu0 0
    %940 = vmatpush1.bf16.msra.mxu0 %v751
    %941 = vmatprep.subr.bf16.mxu0 0
    %942 = vmatpush1.bf16.msra.mxu0 %v752
    %943 = vmatprep.subr.bf16.mxu0 0
    %944 = vmatpush1.bf16.msra.mxu0 %v753
    %945 = vmatprep.subr.bf16.mxu0 0
    %946 = vmatpush1.bf16.msra.mxu0 %v754
    %947 = vmatprep.subr.bf16.mxu0 0
    %948 = vmatpush1.bf16.msra.mxu0 %v755
    %949 = vmatprep.subr.bf16.mxu0 0
    %950 = vmatpush1.bf16.msra.mxu0 %v756
    %951 = vmatprep.subr.bf16.mxu0 0
    %952 = vmatpush1.bf16.msra.mxu0 %v757
    %953 = vmatprep.subr.bf16.mxu0 0
    %954 = vmatpush1.bf16.msra.mxu0 %v758
    %955 = vmatprep.subr.bf16.mxu0 0
    %956 = vmatpush1.bf16.msra.mxu0 %v759
    %957 = vmatprep.subr.bf16.mxu0 0
    %958 = vmatpush1.bf16.msra.mxu0 %v760
    %959 = vmatprep.subr.bf16.mxu0 0
    %960 = vmatpush1.bf16.msra.mxu0 %v761
    %961 = vmatprep.subr.bf16.mxu0 0
    %962 = vmatpush1.bf16.msra.mxu0 %v762
    %963 = vmatprep.subr.bf16.mxu0 0
    %964 = vmatpush1.bf16.msra.mxu0 %v763
    %965 = vmatprep.mubr.bf16.mxu0 %v413
    %966 = vmatmul.mubr.bf16.gmra.mrb[0].mxu0 %v412
    %v967 = vpop.f32.mrb[0].mxu0
    %v968 = vadd.f32 %v879, %v967
    %v969 = vpop.f32.mrb[0].mxu0
    %v970 = vpop.f32.mrb[0].mxu0
    %v971 = vadd.f32 %v882, %v970
    %v972 = vpop.f32.mrb[0].mxu0
    %973 = vmatprep.mubr.bf16.mxu0 %v420
    %974 = vmatmul.mubr.bf16.gmra.mrb[0].mxu0 %v419
    %v975 = vpop.f32.mrb[0].mxu0
    %v976 = vadd.f32 %v887, %v975
    %v977 = vpop.f32.mrb[0].mxu0
    %v978 = vpop.f32.mrb[0].mxu0
    %v979 = vadd.f32 %v890, %v978
    %v980 = vpop.f32.mrb[0].mxu0
    %981 = vmatprep.mubr.bf16.mxu0 %v427
    %982 = vmatmul.mubr.bf16.gmra.mrb[0].mxu0 %v426
    %v983 = vpop.f32.mrb[0].mxu0
    %v984 = vadd.f32 %v895, %v983
    %v985 = vpop.f32.mrb[0].mxu0
    %v986 = vpop.f32.mrb[0].mxu0
    %v987 = vadd.f32 %v898, %v986
    %v988 = vpop.f32.mrb[0].mxu0
    %989 = vmatprep.mubr.bf16.mxu0 %v434
    %990 = vmatmul.mubr.bf16.gmra.mrb[0].mxu0 %v433
    %v991 = vpop.f32.mrb[0].mxu0
    %v992 = vadd.f32 %v903, %v991
    %v993 = vpop.f32.mrb[0].mxu0
    %v994 = vpop.f32.mrb[0].mxu0
    %v995 = vadd.f32 %v906, %v994
    %v996 = vpop.f32.mrb[0].mxu0
    %997 = vmatprep.mubr.bf16.mxu0 %v441
    %998 = vmatmul.mubr.bf16.gmra.mrb[0].mxu0 %v440
    %v999 = vpop.f32.mrb[0].mxu0
    %v1000 = vadd.f32 %v911, %v999
    %v1001 = vpop.f32.mrb[0].mxu0
    %v1002 = vpop.f32.mrb[0].mxu0
    %v1003 = vadd.f32 %v914, %v1002
    %v1004 = vpop.f32.mrb[0].mxu0
    %1005 = vmatprep.mubr.bf16.mxu0 %v448
    %1006 = vmatmul.mubr.bf16.gmra.mrb[0].mxu0 %v447
    %v1007 = vpop.f32.mrb[0].mxu0
    %v1008 = vadd.f32 %v919, %v1007
    %v1009 = vpop.f32.mrb[0].mxu0
    %v1010 = vpop.f32.mrb[0].mxu0
    %v1011 = vadd.f32 %v922, %v1010
    %v1012 = vpop.f32.mrb[0].mxu0
    %1013 = vmatprep.mubr.bf16.mxu0 %v455
    %1014 = vmatmul.mubr.bf16.gmra.mrb[0].mxu0 %v454
    %v1015 = vpop.f32.mrb[0].mxu0
    %v1016 = vadd.f32 %v927, %v1015
    %v1017 = vpop.f32.mrb[0].mxu0
    %v1018 = vpop.f32.mrb[0].mxu0
    %v1019 = vadd.f32 %v930, %v1018
    %v1020 = vpop.f32.mrb[0].mxu0
    %1021 = vdwg.mxu0
    %1022 = vmatprep.subr.bf16.mxu0 0
    %1023 = vmatpush1.bf16.msra.mxu0 %v764
    %1024 = vmatprep.subr.bf16.mxu0 0
    %1025 = vmatpush1.bf16.msra.mxu0 %v765
    %1026 = vmatprep.subr.bf16.mxu0 0
    %1027 = vmatpush1.bf16.msra.mxu0 %v766
    %1028 = vmatprep.subr.bf16.mxu0 0
    %1029 = vmatpush1.bf16.msra.mxu0 %v767
    %1030 = vmatprep.subr.bf16.mxu0 0
    %1031 = vmatpush1.bf16.msra.mxu0 %v768
    %1032 = vmatprep.subr.bf16.mxu0 0
    %1033 = vmatpush1.bf16.msra.mxu0 %v769
    %1034 = vmatprep.subr.bf16.mxu0 0
    %1035 = vmatpush1.bf16.msra.mxu0 %v770
    %1036 = vmatprep.subr.bf16.mxu0 0
    %1037 = vmatpush1.bf16.msra.mxu0 %v771
    %1038 = vmatprep.subr.bf16.mxu0 0
    %1039 = vmatpush1.bf16.msra.mxu0 %v772
    %1040 = vmatprep.subr.bf16.mxu0 0
    %1041 = vmatpush1.bf16.msra.mxu0 %v773
    %1042 = vmatprep.subr.bf16.mxu0 0
    %1043 = vmatpush1.bf16.msra.mxu0 %v774
    %1044 = vmatprep.subr.bf16.mxu0 0
    %1045 = vmatpush1.bf16.msra.mxu0 %v775
    %1046 = vmatprep.subr.bf16.mxu0 0
    %1047 = vmatpush1.bf16.msra.mxu0 %v776
    %1048 = vmatprep.subr.bf16.mxu0 0
    %1049 = vmatpush1.bf16.msra.mxu0 %v777
    %1050 = vmatprep.subr.bf16.mxu0 0
    %1051 = vmatpush1.bf16.msra.mxu0 %v778
    %1052 = vmatprep.subr.bf16.mxu0 0
    %1053 = vmatpush1.bf16.msra.mxu0 %v779
    %1054 = vmatprep.mubr.bf16.mxu0 %v415
    %1055 = vmatmul.mubr.bf16.gmra.mrb[0].mxu0 %v414
    %v1056 = vpop.f32.mrb[0].mxu0
    %v1057 = vadd.f32 %v968, %v1056
    %v1058 = vpop.f32.mrb[0].mxu0
    %v1059 = vpop.f32.mrb[0].mxu0
    %v1060 = vadd.f32 %v971, %v1059
    %v1061 = vpop.f32.mrb[0].mxu0
    %1062 = vmatprep.mubr.bf16.mxu0 %v422
    %1063 = vmatmul.mubr.bf16.gmra.mrb[0].mxu0 %v421
    %v1064 = vpop.f32.mrb[0].mxu0
    %v1065 = vadd.f32 %v976, %v1064
    %v1066 = vpop.f32.mrb[0].mxu0
    %v1067 = vpop.f32.mrb[0].mxu0
    %v1068 = vadd.f32 %v979, %v1067
    %v1069 = vpop.f32.mrb[0].mxu0
    %1070 = vmatprep.mubr.bf16.mxu0 %v429
    %1071 = vmatmul.mubr.bf16.gmra.mrb[0].mxu0 %v428
    %v1072 = vpop.f32.mrb[0].mxu0
    %v1073 = vadd.f32 %v984, %v1072
    %v1074 = vpop.f32.mrb[0].mxu0
    %v1075 = vpop.f32.mrb[0].mxu0
    %v1076 = vadd.f32 %v987, %v1075
    %v1077 = vpop.f32.mrb[0].mxu0
    %1078 = vmatprep.mubr.bf16.mxu0 %v436
    %1079 = vmatmul.mubr.bf16.gmra.mrb[0].mxu0 %v435
    %v1080 = vpop.f32.mrb[0].mxu0
    %v1081 = vadd.f32 %v992, %v1080
    %v1082 = vpop.f32.mrb[0].mxu0
    %v1083 = vpop.f32.mrb[0].mxu0
    %v1084 = vadd.f32 %v995, %v1083
    %v1085 = vpop.f32.mrb[0].mxu0
    %1086 = vmatprep.mubr.bf16.mxu0 %v443
    %1087 = vmatmul.mubr.bf16.gmra.mrb[0].mxu0 %v442
    %v1088 = vpop.f32.mrb[0].mxu0
    %v1089 = vadd.f32 %v1000, %v1088
    %v1090 = vpop.f32.mrb[0].mxu0
    %v1091 = vpop.f32.mrb[0].mxu0
    %v1092 = vadd.f32 %v1003, %v1091
    %v1093 = vpop.f32.mrb[0].mxu0
    %1094 = vmatprep.mubr.bf16.mxu0 %v450
    %1095 = vmatmul.mubr.bf16.gmra.mrb[0].mxu0 %v449
    %v1096 = vpop.f32.mrb[0].mxu0
    %v1097 = vadd.f32 %v1008, %v1096
    %v1098 = vpop.f32.mrb[0].mxu0
    %v1099 = vpop.f32.mrb[0].mxu0
    %v1100 = vadd.f32 %v1011, %v1099
    %v1101 = vpop.f32.mrb[0].mxu0
    %1102 = vmatprep.mubr.bf16.mxu0 %v457
    %1103 = vmatmul.mubr.bf16.gmra.mrb[0].mxu0 %v456
    %v1104 = vpop.f32.mrb[0].mxu0
    %v1105 = vadd.f32 %v1016, %v1104
    %v1106 = vpop.f32.mrb[0].mxu0
    %v1107 = vpop.f32.mrb[0].mxu0
    %v1108 = vadd.f32 %v1019, %v1107
    %v1109 = vpop.f32.mrb[0].mxu0
    %1110 = vdwg.mxu0
    %1111 = vmatprep.subr.bf16.mxu0 0
    %1112 = vmatpush1.bf16.msra.mxu0 %v780
    %1113 = vmatprep.subr.bf16.mxu0 0
    %1114 = vmatpush1.bf16.msra.mxu0 %v781
    %1115 = vmatprep.subr.bf16.mxu0 0
    %1116 = vmatpush1.bf16.msra.mxu0 %v782
    %1117 = vmatprep.subr.bf16.mxu0 0
    %1118 = vmatpush1.bf16.msra.mxu0 %v783
    %1119 = vmatprep.subr.bf16.mxu0 0
    %1120 = vmatpush1.bf16.msra.mxu0 %v784
    %1121 = vmatprep.subr.bf16.mxu0 0
    %1122 = vmatpush1.bf16.msra.mxu0 %v785
    %1123 = vmatprep.subr.bf16.mxu0 0
    %1124 = vmatpush1.bf16.msra.mxu0 %v786
    %1125 = vmatprep.subr.bf16.mxu0 0
    %1126 = vmatpush1.bf16.msra.mxu0 %v787
    %1127 = vmatprep.subr.bf16.mxu0 0
    %1128 = vmatpush1.bf16.msra.mxu0 0
    %1129 = vmatprep.subr.bf16.mxu0 0
    %1130 = vmatpush1.bf16.msra.mxu0 0
    %1131 = vmatprep.subr.bf16.mxu0 0
    %1132 = vmatpush1.bf16.msra.mxu0 0
    %1133 = vmatprep.subr.bf16.mxu0 0
    %1134 = vmatpush1.bf16.msra.mxu0 0
    %1135 = vmatprep.subr.bf16.mxu0 0
    %1136 = vmatpush1.bf16.msra.mxu0 0
    %1137 = vmatprep.subr.bf16.mxu0 0
    %1138 = vmatpush1.bf16.msra.mxu0 0
    %1139 = vmatprep.subr.bf16.mxu0 0
    %1140 = vmatpush1.bf16.msra.mxu0 0
    %1141 = vmatprep.subr.bf16.mxu0 0
    %1142 = vmatpush1.bf16.msra.mxu0 0
    %1143 = vmatprep.mubr.bf16.mxu0 0
    %1144 = vmatmul.mubr.bf16.gmra.mrb[0].mxu0 %v416
    %v1145 = vpop.f32.mrb[0].mxu0
    %v1146 = vadd.f32 %v1057, %v1145
    %v1147 = vpop.f32.mrb[0].mxu0
    %v1148 = vpop.f32.mrb[0].mxu0
    %v1149 = vadd.f32 %v1060, %v1148
    %v1150 = vpop.f32.mrb[0].mxu0
    %1151 = vmatprep.mubr.bf16.mxu0 0
    %1152 = vmatmul.mubr.bf16.gmra.mrb[0].mxu0 %v423
    %v1153 = vpop.f32.mrb[0].mxu0
    %v1154 = vadd.f32 %v1065, %v1153
    %v1155 = vpop.f32.mrb[0].mxu0
    %v1156 = vpop.f32.mrb[0].mxu0
    %v1157 = vadd.f32 %v1068, %v1156
    %v1158 = vpop.f32.mrb[0].mxu0
    %1159 = vmatprep.mubr.bf16.mxu0 0
    %1160 = vmatmul.mubr.bf16.gmra.mrb[0].mxu0 %v430
    %v1161 = vpop.f32.mrb[0].mxu0
    %v1162 = vadd.f32 %v1073, %v1161
    %v1163 = vpop.f32.mrb[0].mxu0
    %v1164 = vpop.f32.mrb[0].mxu0
    %v1165 = vadd.f32 %v1076, %v1164
    %v1166 = vpop.f32.mrb[0].mxu0
    %1167 = vmatprep.mubr.bf16.mxu0 0
    %1168 = vmatmul.mubr.bf16.gmra.mrb[0].mxu0 %v437
    %v1169 = vpop.f32.mrb[0].mxu0
    %v1170 = vadd.f32 %v1081, %v1169
    %v1171 = vpop.f32.mrb[0].mxu0
    %v1172 = vpop.f32.mrb[0].mxu0
    %v1173 = vadd.f32 %v1084, %v1172
    %v1174 = vpop.f32.mrb[0].mxu0
    %1175 = vmatprep.mubr.bf16.mxu0 0
    %1176 = vmatmul.mubr.bf16.gmra.mrb[0].mxu0 %v444
    %v1177 = vpop.f32.mrb[0].mxu0
    %v1178 = vadd.f32 %v1089, %v1177
    %v1179 = vpop.f32.mrb[0].mxu0
    %v1180 = vpop.f32.mrb[0].mxu0
    %v1181 = vadd.f32 %v1092, %v1180
    %v1182 = vpop.f32.mrb[0].mxu0
    %1183 = vmatprep.mubr.bf16.mxu0 0
    %1184 = vmatmul.mubr.bf16.gmra.mrb[0].mxu0 %v451
    %v1185 = vpop.f32.mrb[0].mxu0
    %v1186 = vadd.f32 %v1097, %v1185
    %v1187 = vpop.f32.mrb[0].mxu0
    %v1188 = vpop.f32.mrb[0].mxu0
    %v1189 = vadd.f32 %v1100, %v1188
    %v1190 = vpop.f32.mrb[0].mxu0
    %1191 = vmatprep.mubr.bf16.mxu0 0
    %1192 = vmatmul.mubr.bf16.gmra.mrb[0].mxu0 %v458
    %v1193 = vpop.f32.mrb[0].mxu0
    %v1194 = vadd.f32 %v1105, %v1193
    %v1195 = vpop.f32.mrb[0].mxu0
    %v1196 = vpop.f32.mrb[0].mxu0
    %v1197 = vadd.f32 %v1108, %v1196
    %v1198 = vpop.f32.mrb[0].mxu0
    %1199 = vdwg.mxu0
    %v1200 = vmax.f32 %v1146, 0.0
    %v1201 = vmax.f32 %v1149, 0.0
    %v1202 = vmax.f32 %v1154, 0.0
    %v1203 = vmax.f32 %v1157, 0.0
    %v1204 = vmax.f32 %v1162, 0.0
    %v1205 = vmax.f32 %v1165, 0.0
    %v1206 = vmax.f32 %v1170, 0.0
    %v1207 = vmax.f32 %v1173, 0.0
    %v1208 = vmax.f32 %v1178, 0.0
    %v1209 = vmax.f32 %v1181, 0.0
    %v1210 = vmax.f32 %v1186, 0.0
    %v1211 = vmax.f32 %v1189, 0.0
    %v1212 = vmax.f32 %v1194, 0.0
    %v1213 = vmax.f32 %v1197, 0.0
    %v1214 = vpack.c.bf16 %v1201, %v1200
    %v1215 = vpack.c.bf16 %v1203, %v1202
    %v1216 = vpack.c.bf16 %v1205, %v1204
    %v1217 = vpack.c.bf16 %v1207, %v1206
    %v1218 = vpack.c.bf16 %v1209, %v1208
    %v1219 = vpack.c.bf16 %v1211, %v1210
    %v1220 = vpack.c.bf16 %v1213, %v1212
    %v1221 = vld [vmem:[%s3] sm:$0xf]
    %v1222 = vld [vmem:[%s3 + $0x4] sm:$0xf]
    %v1223 = vld [vmem:[%s3 + $0x8] sm:$0xf]
    %v1224 = vld [vmem:[%s3 + $0xc] sm:$0xf]
    %v1225 = vld [vmem:[%s3 + $0x10] sm:$0xf]
    %v1226 = vld [vmem:[%s3 + $0x14] sm:$0xf]
    %v1227 = vld [vmem:[%s3 + $0x18] sm:$0xf]
    %v1228 = vld [vmem:[%s3 + $0x1c] sm:$0xf]
    %v1229 = vld [vmem:[%s3 + $0x20] sm:$0xf]
    %v1230 = vld [vmem:[%s3 + $0x24] sm:$0xf]
    %v1231 = vld [vmem:[%s3 + $0x28] sm:$0xf]
    %v1232 = vld [vmem:[%s3 + $0x2c] sm:$0xf]
    %v1233 = vld [vmem:[%s3 + $0x30] sm:$0xf]
    %v1234 = vld [vmem:[%s3 + $0x34] sm:$0xf]
    %v1235 = vld [vmem:[%s3 + $0x38] sm:$0xf]
    %v1236 = vld [vmem:[%s3 + $0x3c] sm:$0xf]
    %v1237 = vld [vmem:[%s4] sm:$0x1]
    %v1239 = vlaneseq
    %v1240 = vshrl.u32 %v1239, 7
    %v1241 = vsub.s32 0, %v1240
    %v1242 = vrot.slane %v1237, %v1241
    %v1260 = vunpack.c.l.b16 %v1221
    %v1261 = vunpack.c.l.b16 %v1222
    %v1262 = vunpack.c.l.b16 %v1223
    %v1263 = vunpack.c.l.b16 %v1224
    %v1264 = vunpack.c.l.b16 %v1225
    %v1265 = vunpack.c.l.b16 %v1226
    %v1266 = vunpack.c.l.b16 %v1227
    %v1267 = vunpack.c.l.b16 %v1228
    %v1268 = vunpack.c.l.b16 %v1229
    %v1269 = vunpack.c.l.b16 %v1230
    %v1270 = vunpack.c.l.b16 %v1231
    %v1271 = vunpack.c.l.b16 %v1232
    %v1272 = vunpack.c.l.b16 %v1233
    %v1273 = vunpack.c.l.b16 %v1234
    %v1274 = vunpack.c.l.b16 %v1235
    %v1275 = vunpack.c.l.b16 %v1236
    %v1276 = vpack.c.b16 %v1261, %v1260
    %v1277 = vpack.c.b16 %v1263, %v1262
    %v1278 = vpack.c.b16 %v1265, %v1264
    %v1279 = vpack.c.b16 %v1267, %v1266
    %v1280 = vpack.c.b16 %v1269, %v1268
    %v1281 = vpack.c.b16 %v1271, %v1270
    %v1282 = vpack.c.b16 %v1273, %v1272
    %v1283 = vpack.c.b16 %v1275, %v1274
    %1292 = vmatprep.subr.bf16.mxu0 0
    %1293 = vmatpush1.bf16.msra.mxu0 %v1276
    %1294 = vmatprep.subr.bf16.mxu0 0
    %1295 = vmatpush1.bf16.msra.mxu0 %v1277
    %1296 = vmatprep.subr.bf16.mxu0 0
    %1297 = vmatpush1.bf16.msra.mxu0 %v1278
    %1298 = vmatprep.subr.bf16.mxu0 0
    %1299 = vmatpush1.bf16.msra.mxu0 %v1279
    %1300 = vmatprep.subr.bf16.mxu0 0
    %1301 = vmatpush1.bf16.msra.mxu0 %v1280
    %1302 = vmatprep.subr.bf16.mxu0 0
    %1303 = vmatpush1.bf16.msra.mxu0 %v1281
    %1304 = vmatprep.subr.bf16.mxu0 0
    %1305 = vmatpush1.bf16.msra.mxu0 %v1282
    %1306 = vmatprep.subr.bf16.mxu0 0
    %1307 = vmatpush1.bf16.msra.mxu0 %v1283
    %1308 = vmatprep.subr.bf16.mxu0 0
    %1309 = vmatpush1.bf16.msra.mxu0 0
    %1310 = vmatprep.subr.bf16.mxu0 0
    %1311 = vmatpush1.bf16.msra.mxu0 0
    %1312 = vmatprep.subr.bf16.mxu0 0
    %1313 = vmatpush1.bf16.msra.mxu0 0
    %1314 = vmatprep.subr.bf16.mxu0 0
    %1315 = vmatpush1.bf16.msra.mxu0 0
    %1316 = vmatprep.subr.bf16.mxu0 0
    %1317 = vmatpush1.bf16.msra.mxu0 0
    %1318 = vmatprep.subr.bf16.mxu0 0
    %1319 = vmatpush1.bf16.msra.mxu0 0
    %1320 = vmatprep.subr.bf16.mxu0 0
    %1321 = vmatpush1.bf16.msra.mxu0 0
    %1322 = vmatprep.subr.bf16.mxu0 0
    %1323 = vmatpush1.bf16.msra.mxu0 0
    %1324 = vmatprep.mubr.bf16.mxu0 0
    %1325 = vmatmul.mubr.bf16.gmra.mrb[0].mxu0 %v1214
    %v1326 = vpop.f32.mrb[0].mxu0
    %v1327 = vadd.f32 %v1242, %v1326
    %v1328 = vpop.f32.mrb[0].mxu0
    %v1329 = vpop.f32.mrb[0].mxu0
    %v1330 = vadd.f32 %v1242, %v1329
    %v1331 = vpop.f32.mrb[0].mxu0
    %1332 = vmatprep.mubr.bf16.mxu0 0
    %1333 = vmatmul.mubr.bf16.gmra.mrb[0].mxu0 %v1215
    %v1334 = vpop.f32.mrb[0].mxu0
    %v1335 = vadd.f32 %v1242, %v1334
    %v1336 = vpop.f32.mrb[0].mxu0
    %v1337 = vpop.f32.mrb[0].mxu0
    %v1338 = vadd.f32 %v1242, %v1337
    %v1339 = vpop.f32.mrb[0].mxu0
    %1340 = vmatprep.mubr.bf16.mxu0 0
    %1341 = vmatmul.mubr.bf16.gmra.mrb[0].mxu0 %v1216
    %v1342 = vpop.f32.mrb[0].mxu0
    %v1343 = vadd.f32 %v1242, %v1342
    %v1344 = vpop.f32.mrb[0].mxu0
    %v1345 = vpop.f32.mrb[0].mxu0
    %v1346 = vadd.f32 %v1242, %v1345
    %v1347 = vpop.f32.mrb[0].mxu0
    %1348 = vmatprep.mubr.bf16.mxu0 0
    %1349 = vmatmul.mubr.bf16.gmra.mrb[0].mxu0 %v1217
    %v1350 = vpop.f32.mrb[0].mxu0
    %v1351 = vadd.f32 %v1242, %v1350
    %v1352 = vpop.f32.mrb[0].mxu0
    %v1353 = vpop.f32.mrb[0].mxu0
    %v1354 = vadd.f32 %v1242, %v1353
    %v1355 = vpop.f32.mrb[0].mxu0
    %1356 = vmatprep.mubr.bf16.mxu0 0
    %1357 = vmatmul.mubr.bf16.gmra.mrb[0].mxu0 %v1218
    %v1358 = vpop.f32.mrb[0].mxu0
    %v1359 = vadd.f32 %v1242, %v1358
    %v1360 = vpop.f32.mrb[0].mxu0
    %v1361 = vpop.f32.mrb[0].mxu0
    %v1362 = vadd.f32 %v1242, %v1361
    %v1363 = vpop.f32.mrb[0].mxu0
    %1364 = vmatprep.mubr.bf16.mxu0 0
    %1365 = vmatmul.mubr.bf16.gmra.mrb[0].mxu0 %v1219
    %v1366 = vpop.f32.mrb[0].mxu0
    %v1367 = vadd.f32 %v1242, %v1366
    %v1368 = vpop.f32.mrb[0].mxu0
    %v1369 = vpop.f32.mrb[0].mxu0
    %v1370 = vadd.f32 %v1242, %v1369
    %v1371 = vpop.f32.mrb[0].mxu0
    %1372 = vmatprep.mubr.bf16.mxu0 0
    %1373 = vmatmul.mubr.bf16.gmra.mrb[0].mxu0 %v1220
    %v1374 = vpop.f32.mrb[0].mxu0
    %v1375 = vadd.f32 %v1242, %v1374
    %v1376 = vpop.f32.mrb[0].mxu0
    %v1377 = vpop.f32.mrb[0].mxu0
    %v1378 = vadd.f32 %v1242, %v1377
    %v1379 = vpop.f32.mrb[0].mxu0
    %1380 = vdwg.mxu0
    %v1381 = vmax.f32 %v1327, 0.0
    %v1382 = vmax.f32 %v1330, 0.0
    %v1383 = vmax.f32 %v1335, 0.0
    %v1384 = vmax.f32 %v1338, 0.0
    %v1385 = vmax.f32 %v1343, 0.0
    %v1386 = vmax.f32 %v1346, 0.0
    %v1387 = vmax.f32 %v1351, 0.0
    %v1388 = vmax.f32 %v1354, 0.0
    %v1389 = vmax.f32 %v1359, 0.0
    %v1390 = vmax.f32 %v1362, 0.0
    %v1391 = vmax.f32 %v1367, 0.0
    %v1392 = vmax.f32 %v1370, 0.0
    %v1393 = vmax.f32 %v1375, 0.0
    %v1394 = vmax.f32 %v1378, 0.0
    %v1395 = vpack.c.bf16 %v1382, %v1381
    %v1396 = vpack.c.bf16 %v1384, %v1383
    %v1397 = vpack.c.bf16 %v1386, %v1385
    %v1398 = vpack.c.bf16 %v1388, %v1387
    %v1399 = vpack.c.bf16 %v1390, %v1389
    %v1400 = vpack.c.bf16 %v1392, %v1391
    %v1401 = vpack.c.bf16 %v1394, %v1393
    %v1402 = vld [vmem:[%s5] sm:$0xf]
    %v1403 = vld [vmem:[%s5 + $0x4] sm:$0xf]
    %v1404 = vld [vmem:[%s5 + $0x8] sm:$0xf]
    %v1405 = vld [vmem:[%s5 + $0xc] sm:$0xf]
    %v1406 = vld [vmem:[%s5 + $0x10] sm:$0xf]
    %v1407 = vld [vmem:[%s5 + $0x14] sm:$0xf]
    %v1408 = vld [vmem:[%s5 + $0x18] sm:$0xf]
    %v1409 = vld [vmem:[%s5 + $0x1c] sm:$0xf]
    %v1410 = vld [vmem:[%s6] sm:$0x1]
    %v1412 = vlaneseq
    %v1413 = vshrl.u32 %v1412, 7
    %v1414 = vsub.s32 0, %v1413
    %v1415 = vrot.slane %v1410, %v1414
    %v1425 = vunpack.c.l.b16 %v1402
    %v1426 = vunpack.c.l.b16 %v1403
    %v1427 = vunpack.c.l.b16 %v1404
    %v1428 = vunpack.c.l.b16 %v1405
    %v1429 = vunpack.c.l.b16 %v1406
    %v1430 = vunpack.c.l.b16 %v1407
    %v1431 = vunpack.c.l.b16 %v1408
    %v1432 = vunpack.c.l.b16 %v1409
    %v1433 = vpack.c.b16 %v1426, %v1425
    %v1434 = vpack.c.b16 %v1428, %v1427
    %v1435 = vpack.c.b16 %v1430, %v1429
    %v1436 = vpack.c.b16 %v1432, %v1431
    %vm1441 = vcmask 523264
    %v1443 = vsel %vm1441, %v1395, 0
    %v1446 = vsel %vm1441, %v1396, 0
    %v1449 = vsel %vm1441, %v1397, 0
    %v1452 = vsel %vm1441, %v1398, 0
    %v1455 = vsel %vm1441, %v1399, 0
    %v1458 = vsel %vm1441, %v1400, 0
    %v1461 = vsel %vm1441, %v1401, 0
    %1463 = vmatprep.subr.bf16.mxu0 0
    %1464 = vmatpush1.bf16.msra.mxu0 %v1433
    %1465 = vmatprep.subr.bf16.mxu0 0
    %1466 = vmatpush1.bf16.msra.mxu0 %v1434
    %1467 = vmatprep.subr.bf16.mxu0 0
    %1468 = vmatpush1.bf16.msra.mxu0 %v1435
    %1469 = vmatprep.subr.bf16.mxu0 0
    %1470 = vmatpush1.bf16.msra.mxu0 %v1436
    %1471 = vmatprep.subr.bf16.mxu0 0
    %1472 = vmatpush1.bf16.msra.mxu0 0
    %1473 = vmatprep.subr.bf16.mxu0 0
    %1474 = vmatpush1.bf16.msra.mxu0 0
    %1475 = vmatprep.subr.bf16.mxu0 0
    %1476 = vmatpush1.bf16.msra.mxu0 0
    %1477 = vmatprep.subr.bf16.mxu0 0
    %1478 = vmatpush1.bf16.msra.mxu0 0
    %1479 = vmatprep.subr.bf16.mxu0 0
    %1480 = vmatpush1.bf16.msra.mxu0 0
    %1481 = vmatprep.subr.bf16.mxu0 0
    %1482 = vmatpush1.bf16.msra.mxu0 0
    %1483 = vmatprep.subr.bf16.mxu0 0
    %1484 = vmatpush1.bf16.msra.mxu0 0
    %1485 = vmatprep.subr.bf16.mxu0 0
    %1486 = vmatpush1.bf16.msra.mxu0 0
    %1487 = vmatprep.subr.bf16.mxu0 0
    %1488 = vmatpush1.bf16.msra.mxu0 0
    %1489 = vmatprep.subr.bf16.mxu0 0
    %1490 = vmatpush1.bf16.msra.mxu0 0
    %1491 = vmatprep.subr.bf16.mxu0 0
    %1492 = vmatpush1.bf16.msra.mxu0 0
    %1493 = vmatprep.subr.bf16.mxu0 0
    %1494 = vmatpush1.bf16.msra.mxu0 0
    %1495 = vmatprep.mubr.bf16.mxu0 0
    %1496 = vmatmul.mubr.bf16.gmra.mrb[0].mxu0 %v1443
    %v1497 = vpop.f32.mrb[0].mxu0
    %v1498 = vadd.f32 %v1415, %v1497
    %v1499 = vpop.f32.mrb[0].mxu0
    %v1500 = vpop.f32.mrb[0].mxu0
    %v1501 = vadd.f32 %v1415, %v1500
    %v1502 = vpop.f32.mrb[0].mxu0
    %1503 = vmatprep.mubr.bf16.mxu0 0
    %1504 = vmatmul.mubr.bf16.gmra.mrb[0].mxu0 %v1446
    %v1505 = vpop.f32.mrb[0].mxu0
    %v1506 = vadd.f32 %v1415, %v1505
    %v1507 = vpop.f32.mrb[0].mxu0
    %v1508 = vpop.f32.mrb[0].mxu0
    %v1509 = vadd.f32 %v1415, %v1508
    %v1510 = vpop.f32.mrb[0].mxu0
    %1511 = vmatprep.mubr.bf16.mxu0 0
    %1512 = vmatmul.mubr.bf16.gmra.mrb[0].mxu0 %v1449
    %v1513 = vpop.f32.mrb[0].mxu0
    %v1514 = vadd.f32 %v1415, %v1513
    %v1515 = vpop.f32.mrb[0].mxu0
    %v1516 = vpop.f32.mrb[0].mxu0
    %v1517 = vadd.f32 %v1415, %v1516
    %v1518 = vpop.f32.mrb[0].mxu0
    %1519 = vmatprep.mubr.bf16.mxu0 0
    %1520 = vmatmul.mubr.bf16.gmra.mrb[0].mxu0 %v1452
    %v1521 = vpop.f32.mrb[0].mxu0
    %v1522 = vadd.f32 %v1415, %v1521
    %v1523 = vpop.f32.mrb[0].mxu0
    %v1524 = vpop.f32.mrb[0].mxu0
    %v1525 = vadd.f32 %v1415, %v1524
    %v1526 = vpop.f32.mrb[0].mxu0
    %1527 = vmatprep.mubr.bf16.mxu0 0
    %1528 = vmatmul.mubr.bf16.gmra.mrb[0].mxu0 %v1455
    %v1529 = vpop.f32.mrb[0].mxu0
    %v1530 = vadd.f32 %v1415, %v1529
    %v1531 = vpop.f32.mrb[0].mxu0
    %v1532 = vpop.f32.mrb[0].mxu0
    %v1533 = vadd.f32 %v1415, %v1532
    %v1534 = vpop.f32.mrb[0].mxu0
    %1535 = vmatprep.mubr.bf16.mxu0 0
    %1536 = vmatmul.mubr.bf16.gmra.mrb[0].mxu0 %v1458
    %v1537 = vpop.f32.mrb[0].mxu0
    %v1538 = vadd.f32 %v1415, %v1537
    %v1539 = vpop.f32.mrb[0].mxu0
    %v1540 = vpop.f32.mrb[0].mxu0
    %v1541 = vadd.f32 %v1415, %v1540
    %v1542 = vpop.f32.mrb[0].mxu0
    %1543 = vmatprep.mubr.bf16.mxu0 0
    %1544 = vmatmul.mubr.bf16.gmra.mrb[0].mxu0 %v1461
    %v1545 = vpop.f32.mrb[0].mxu0
    %v1546 = vadd.f32 %v1415, %v1545
    %v1547 = vpop.f32.mrb[0].mxu0
    %v1548 = vpop.f32.mrb[0].mxu0
    %v1549 = vadd.f32 %v1415, %v1548
    %v1550 = vpop.f32.mrb[0].mxu0
    %1551 = vdwg.mxu0
    %v1552 = vmax.f32 %v1498, 0.0
    %v1553 = vmax.f32 %v1501, 0.0
    %v1554 = vmax.f32 %v1506, 0.0
    %v1555 = vmax.f32 %v1509, 0.0
    %v1556 = vmax.f32 %v1514, 0.0
    %v1557 = vmax.f32 %v1517, 0.0
    %v1558 = vmax.f32 %v1522, 0.0
    %v1559 = vmax.f32 %v1525, 0.0
    %v1560 = vmax.f32 %v1530, 0.0
    %v1561 = vmax.f32 %v1533, 0.0
    %v1562 = vmax.f32 %v1538, 0.0
    %v1563 = vmax.f32 %v1541, 0.0
    %v1564 = vmax.f32 %v1546, 0.0
    %v1565 = vmax.f32 %v1549, 0.0
    %v1566 = vpack.c.bf16 %v1553, %v1552
    %v1567 = vpack.c.bf16 %v1555, %v1554
    %v1568 = vpack.c.bf16 %v1557, %v1556
    %v1569 = vpack.c.bf16 %v1559, %v1558
    %v1570 = vpack.c.bf16 %v1561, %v1560
    %v1571 = vpack.c.bf16 %v1563, %v1562
    %v1572 = vpack.c.bf16 %v1565, %v1564
    %v1573 = vld [vmem:[%s7] sm:$0xf]
    %v1574 = vld [vmem:[%s7 + $0x4] sm:$0xf]
    %v1575 = vld [vmem:[%s7 + $0x8] sm:$0xf]
    %v1576 = vld [vmem:[%s7 + $0xc] sm:$0xf]
    %v1577 = vld [vmem:[%s7 + $0x10] sm:$0xf]
    %v1578 = vld [vmem:[%s7 + $0x14] sm:$0xf]
    %v1579 = vld [vmem:[%s7 + $0x18] sm:$0xf]
    %v1580 = vld [vmem:[%s7 + $0x1c] sm:$0xf]
    %v1581 = vld [vmem:[%s8] sm:$0x1]
    %v1583 = vlaneseq
    %v1584 = vshrl.u32 %v1583, 7
    %v1585 = vsub.s32 0, %v1584
    %v1586 = vrot.slane %v1581, %v1585
    %v1596 = vunpack.c.l.b16 %v1573
    %v1597 = vunpack.c.l.b16 %v1574
    %v1598 = vunpack.c.l.b16 %v1575
    %v1599 = vunpack.c.l.b16 %v1576
    %v1600 = vunpack.c.l.b16 %v1577
    %v1601 = vunpack.c.l.b16 %v1578
    %v1602 = vunpack.c.l.b16 %v1579
    %v1603 = vunpack.c.l.b16 %v1580
    %v1604 = vpack.c.b16 %v1597, %v1596
    %v1605 = vpack.c.b16 %v1599, %v1598
    %v1606 = vpack.c.b16 %v1601, %v1600
    %v1607 = vpack.c.b16 %v1603, %v1602
    %v1613 = vsel %vm1441, %v1566, 0
    %v1616 = vsel %vm1441, %v1567, 0
    %v1619 = vsel %vm1441, %v1568, 0
    %v1622 = vsel %vm1441, %v1569, 0
    %v1625 = vsel %vm1441, %v1570, 0
    %v1628 = vsel %vm1441, %v1571, 0
    %v1631 = vsel %vm1441, %v1572, 0
    %1633 = vmatprep.subr.bf16.mxu0 0
    %1634 = vmatpush1.bf16.msra.mxu0 %v1604
    %1635 = vmatprep.subr.bf16.mxu0 0
    %1636 = vmatpush1.bf16.msra.mxu0 %v1605
    %1637 = vmatprep.subr.bf16.mxu0 0
    %1638 = vmatpush1.bf16.msra.mxu0 %v1606
    %1639 = vmatprep.subr.bf16.mxu0 0
    %1640 = vmatpush1.bf16.msra.mxu0 %v1607
    %1641 = vmatprep.subr.bf16.mxu0 0
    %1642 = vmatpush1.bf16.msra.mxu0 0
    %1643 = vmatprep.subr.bf16.mxu0 0
    %1644 = vmatpush1.bf16.msra.mxu0 0
    %1645 = vmatprep.subr.bf16.mxu0 0
    %1646 = vmatpush1.bf16.msra.mxu0 0
    %1647 = vmatprep.subr.bf16.mxu0 0
    %1648 = vmatpush1.bf16.msra.mxu0 0
    %1649 = vmatprep.subr.bf16.mxu0 0
    %1650 = vmatpush1.bf16.msra.mxu0 0
    %1651 = vmatprep.subr.bf16.mxu0 0
    %1652 = vmatpush1.bf16.msra.mxu0 0
    %1653 = vmatprep.subr.bf16.mxu0 0
    %1654 = vmatpush1.bf16.msra.mxu0 0
    %1655 = vmatprep.subr.bf16.mxu0 0
    %1656 = vmatpush1.bf16.msra.mxu0 0
    %1657 = vmatprep.subr.bf16.mxu0 0
    %1658 = vmatpush1.bf16.msra.mxu0 0
    %1659 = vmatprep.subr.bf16.mxu0 0
    %1660 = vmatpush1.bf16.msra.mxu0 0
    %1661 = vmatprep.subr.bf16.mxu0 0
    %1662 = vmatpush1.bf16.msra.mxu0 0
    %1663 = vmatprep.subr.bf16.mxu0 0
    %1664 = vmatpush1.bf16.msra.mxu0 0
    %1665 = vmatprep.mubr.bf16.mxu0 0
    %1666 = vmatmul.mubr.bf16.gmra.mrb[0].mxu0 %v1613
    %v1667 = vpop.f32.mrb[0].mxu0
    %v1668 = vadd.f32 %v1586, %v1667
    %v1669 = vpop.f32.mrb[0].mxu0
    %v1670 = vpop.f32.mrb[0].mxu0
    %v1671 = vadd.f32 %v1586, %v1670
    %v1672 = vpop.f32.mrb[0].mxu0
    %1673 = vmatprep.mubr.bf16.mxu0 0
    %1674 = vmatmul.mubr.bf16.gmra.mrb[0].mxu0 %v1616
    %v1675 = vpop.f32.mrb[0].mxu0
    %v1676 = vadd.f32 %v1586, %v1675
    %v1677 = vpop.f32.mrb[0].mxu0
    %v1678 = vpop.f32.mrb[0].mxu0
    %v1679 = vadd.f32 %v1586, %v1678
    %v1680 = vpop.f32.mrb[0].mxu0
    %1681 = vmatprep.mubr.bf16.mxu0 0
    %1682 = vmatmul.mubr.bf16.gmra.mrb[0].mxu0 %v1619
    %v1683 = vpop.f32.mrb[0].mxu0
    %v1684 = vadd.f32 %v1586, %v1683
    %v1685 = vpop.f32.mrb[0].mxu0
    %v1686 = vpop.f32.mrb[0].mxu0
    %v1687 = vadd.f32 %v1586, %v1686
    %v1688 = vpop.f32.mrb[0].mxu0
    %1689 = vmatprep.mubr.bf16.mxu0 0
    %1690 = vmatmul.mubr.bf16.gmra.mrb[0].mxu0 %v1622
    %v1691 = vpop.f32.mrb[0].mxu0
    %v1692 = vadd.f32 %v1586, %v1691
    %v1693 = vpop.f32.mrb[0].mxu0
    %v1694 = vpop.f32.mrb[0].mxu0
    %v1695 = vadd.f32 %v1586, %v1694
    %v1696 = vpop.f32.mrb[0].mxu0
    %1697 = vmatprep.mubr.bf16.mxu0 0
    %1698 = vmatmul.mubr.bf16.gmra.mrb[0].mxu0 %v1625
    %v1699 = vpop.f32.mrb[0].mxu0
    %v1700 = vadd.f32 %v1586, %v1699
    %v1701 = vpop.f32.mrb[0].mxu0
    %v1702 = vpop.f32.mrb[0].mxu0
    %v1703 = vadd.f32 %v1586, %v1702
    %v1704 = vpop.f32.mrb[0].mxu0
    %1705 = vmatprep.mubr.bf16.mxu0 0
    %1706 = vmatmul.mubr.bf16.gmra.mrb[0].mxu0 %v1628
    %v1707 = vpop.f32.mrb[0].mxu0
    %v1708 = vadd.f32 %v1586, %v1707
    %v1709 = vpop.f32.mrb[0].mxu0
    %v1710 = vpop.f32.mrb[0].mxu0
    %v1711 = vadd.f32 %v1586, %v1710
    %v1712 = vpop.f32.mrb[0].mxu0
    %1713 = vmatprep.mubr.bf16.mxu0 0
    %1714 = vmatmul.mubr.bf16.gmra.mrb[0].mxu0 %v1631
    %v1715 = vpop.f32.mrb[0].mxu0
    %v1716 = vadd.f32 %v1586, %v1715
    %v1717 = vpop.f32.mrb[0].mxu0
    %v1718 = vpop.f32.mrb[0].mxu0
    %v1719 = vadd.f32 %v1586, %v1718
    %v1720 = vpop.f32.mrb[0].mxu0
    %1721 = vdwg.mxu0
    %v1722 = vmax.f32 %v1668, 0.0
    %v1723 = vmax.f32 %v1671, 0.0
    %v1724 = vmax.f32 %v1676, 0.0
    %v1725 = vmax.f32 %v1679, 0.0
    %v1726 = vmax.f32 %v1684, 0.0
    %v1727 = vmax.f32 %v1687, 0.0
    %v1728 = vmax.f32 %v1692, 0.0
    %v1729 = vmax.f32 %v1695, 0.0
    %v1730 = vmax.f32 %v1700, 0.0
    %v1731 = vmax.f32 %v1703, 0.0
    %v1732 = vmax.f32 %v1708, 0.0
    %v1733 = vmax.f32 %v1711, 0.0
    %v1734 = vmax.f32 %v1716, 0.0
    %v1735 = vmax.f32 %v1719, 0.0
    %v1736 = vpack.c.bf16 %v1723, %v1722
    %v1737 = vpack.c.bf16 %v1725, %v1724
    %v1738 = vpack.c.bf16 %v1727, %v1726
    %v1739 = vpack.c.bf16 %v1729, %v1728
    %v1740 = vpack.c.bf16 %v1731, %v1730
    %v1741 = vpack.c.bf16 %v1733, %v1732
    %v1742 = vpack.c.bf16 %v1735, %v1734
    %v1743 = vld [vmem:[#allocation7] sm:$0xff]
    %v1744 = vld [vmem:[#allocation7 + $0x8] sm:$0xff]
    %v1745 = vld [vmem:[#allocation7 + $0x10] sm:$0xff]
    %v1746 = vld [vmem:[#allocation7 + $0x18] sm:$0xf]
    %v1747 = vld [vmem:[#allocation7 + $0x1c] sm:$0xff]
    %v1748 = vld [vmem:[#allocation7 + $0x24] sm:$0xff]
    %v1749 = vld [vmem:[#allocation7 + $0x2c] sm:$0xff]
    %v1750 = vld [vmem:[#allocation7 + $0x34] sm:$0xf]
    %v1751 = vld [vmem:[#allocation7 + $0x38] sm:$0xff]
    %v1752 = vld [vmem:[#allocation7 + $0x40] sm:$0xff]
    %v1753 = vld [vmem:[#allocation7 + $0x48] sm:$0xff]
    %v1754 = vld [vmem:[#allocation7 + $0x50] sm:$0xf]
    %v1755 = vld [vmem:[#allocation7 + $0x54] sm:$0xff]
    %v1756 = vld [vmem:[#allocation7 + $0x5c] sm:$0xff]
    %v1757 = vld [vmem:[#allocation7 + $0x64] sm:$0xff]
    %v1758 = vld [vmem:[#allocation7 + $0x6c] sm:$0xf]
    %v1759 = vld [vmem:[#allocation7 + $0x70] sm:$0xff]
    %v1760 = vld [vmem:[#allocation7 + $0x78] sm:$0xff]
    %v1761 = vld [vmem:[#allocation7 + $0x80] sm:$0xff]
    %v1762 = vld [vmem:[#allocation7 + $0x88] sm:$0xf]
    %v1763 = vld [vmem:[#allocation7 + $0x8c] sm:$0xff]
    %v1764 = vld [vmem:[#allocation7 + $0x94] sm:$0xff]
    %v1765 = vld [vmem:[#allocation7 + $0x9c] sm:$0xff]
    %v1766 = vld [vmem:[#allocation7 + $0xa4] sm:$0xf]
    %v1767 = vld [vmem:[#allocation7 + $0xa8] sm:$0xff]
    %v1768 = vld [vmem:[#allocation7 + $0xb0] sm:$0xff]
    %v1769 = vld [vmem:[#allocation7 + $0xb8] sm:$0xff]
    %v1770 = vld [vmem:[#allocation7 + $0xc0] sm:$0xf]
    %v1771 = vld [vmem:[#allocation7 + $0xc4] sm:$0xff]
    %v1772 = vld [vmem:[#allocation7 + $0xcc] sm:$0xff]
    %v1773 = vld [vmem:[#allocation7 + $0xd4] sm:$0xff]
    %v1774 = vld [vmem:[#allocation7 + $0xdc] sm:$0xf]
    %v1775 = vld [vmem:[#allocation7 + $0xe0] sm:$0xff]
    %v1776 = vld [vmem:[#allocation7 + $0xe8] sm:$0xff]
    %v1777 = vld [vmem:[#allocation7 + $0xf0] sm:$0xff]
    %v1778 = vld [vmem:[#allocation7 + $0xf8] sm:$0xf]
    %v1779 = vld [vmem:[#allocation7 + $0xfc] sm:$0xff]
    %v1780 = vld [vmem:[#allocation7 + $0x104] sm:$0xff]
    %v1781 = vld [vmem:[#allocation7 + $0x10c] sm:$0xff]
    %v1782 = vld [vmem:[#allocation7 + $0x114] sm:$0xf]
    %v1783 = vld [vmem:[#allocation7 + $0x118] sm:$0xff]
    %v1784 = vld [vmem:[#allocation7 + $0x120] sm:$0xff]
    %v1785 = vld [vmem:[#allocation7 + $0x128] sm:$0xff]
    %v1786 = vld [vmem:[#allocation7 + $0x130] sm:$0xf]
    %v1787 = vld [vmem:[#allocation7 + $0x134] sm:$0xff]
    %v1788 = vld [vmem:[#allocation7 + $0x13c] sm:$0xff]
    %v1789 = vld [vmem:[#allocation7 + $0x144] sm:$0xff]
    %v1790 = vld [vmem:[#allocation7 + $0x14c] sm:$0xf]
    %v1791 = vld [vmem:[#allocation7 + $0x150] sm:$0xff]
    %v1792 = vld [vmem:[#allocation7 + $0x158] sm:$0xff]
    %v1793 = vld [vmem:[#allocation7 + $0x160] sm:$0xff]
    %v1794 = vld [vmem:[#allocation7 + $0x168] sm:$0xf]
    %v1795 = vld [vmem:[#allocation7 + $0x16c] sm:$0xff]
    %v1796 = vld [vmem:[#allocation7 + $0x174] sm:$0xff]
    %v1797 = vld [vmem:[#allocation7 + $0x17c] sm:$0xff]
    %v1798 = vld [vmem:[#allocation7 + $0x184] sm:$0xf]
    %v1799 = vld [vmem:[#allocation7 + $0x188] sm:$0xff]
    %v1800 = vld [vmem:[#allocation7 + $0x190] sm:$0xff]
    %v1801 = vld [vmem:[#allocation7 + $0x198] sm:$0xff]
    %v1802 = vld [vmem:[#allocation7 + $0x1a0] sm:$0xf]
    %v1803 = vld [vmem:[#allocation7 + $0x1a4] sm:$0xff]
    %v1804 = vld [vmem:[#allocation7 + $0x1ac] sm:$0xff]
    %v1805 = vld [vmem:[#allocation7 + $0x1b4] sm:$0xff]
    %v1806 = vld [vmem:[#allocation7 + $0x1bc] sm:$0xf]
    %v1807 = vld [vmem:[%s10] sm:$0xff]
    %v1809 = vlaneseq
    %v1810 = vshrl.u32 %v1809, 7
    %v1811 = vsub.s32 0, %v1810
    %v1812 = vrot.slane %v1807, %v1811
    %v1813 = vlaneseq
    %v1814 = vshrl.u32 %v1813, 7
    %v1815 = vsub.s32 1, %v1814
    %v1816 = vrot.slane %v1807, %v1815
    %v1817 = vlaneseq
    %v1818 = vshrl.u32 %v1817, 7
    %v1819 = vsub.s32 2, %v1818
    %v1820 = vrot.slane %v1807, %v1819
    %v1821 = vlaneseq
    %v1822 = vshrl.u32 %v1821, 7
    %v1823 = vsub.s32 3, %v1822
    %v1824 = vrot.slane %v1807, %v1823
    %v1825 = vlaneseq
    %v1826 = vshrl.u32 %v1825, 7
    %v1827 = vsub.s32 4, %v1826
    %v1828 = vrot.slane %v1807, %v1827
    %v1829 = vlaneseq
    %v1830 = vshrl.u32 %v1829, 7
    %v1831 = vsub.s32 5, %v1830
    %v1832 = vrot.slane %v1807, %v1831
    %v1833 = vlaneseq
    %v1834 = vshrl.u32 %v1833, 7
    %v1835 = vsub.s32 6, %v1834
    %v1836 = vrot.slane %v1807, %v1835
    %v1908 = vunpack.c.l.b16 %v1743
    %v1909 = vunpack.c.h.b16 %v1743
    %v1910 = vunpack.c.l.b16 %v1744
    %v1911 = vunpack.c.h.b16 %v1744
    %v1912 = vunpack.c.l.b16 %v1745
    %v1913 = vunpack.c.h.b16 %v1745
    %v1914 = vunpack.c.l.b16 %v1746
    %v1915 = vunpack.c.l.b16 %v1747
    %v1916 = vunpack.c.h.b16 %v1747
    %v1917 = vunpack.c.l.b16 %v1748
    %v1918 = vunpack.c.h.b16 %v1748
    %v1919 = vunpack.c.l.b16 %v1749
    %v1920 = vunpack.c.h.b16 %v1749
    %v1921 = vunpack.c.l.b16 %v1750
    %v1922 = vunpack.c.l.b16 %v1751
    %v1923 = vunpack.c.h.b16 %v1751
    %v1924 = vunpack.c.l.b16 %v1752
    %v1925 = vunpack.c.h.b16 %v1752
    %v1926 = vunpack.c.l.b16 %v1753
    %v1927 = vunpack.c.h.b16 %v1753
    %v1928 = vunpack.c.l.b16 %v1754
    %v1929 = vunpack.c.l.b16 %v1755
    %v1930 = vunpack.c.h.b16 %v1755
    %v1931 = vunpack.c.l.b16 %v1756
    %v1932 = vunpack.c.h.b16 %v1756
    %v1933 = vunpack.c.l.b16 %v1757
    %v1934 = vunpack.c.h.b16 %v1757
    %v1935 = vunpack.c.l.b16 %v1758
    %v1936 = vunpack.c.l.b16 %v1759
    %v1937 = vunpack.c.h.b16 %v1759
    %v1938 = vunpack.c.l.b16 %v1760
    %v1939 = vunpack.c.h.b16 %v1760
    %v1940 = vunpack.c.l.b16 %v1761
    %v1941 = vunpack.c.h.b16 %v1761
    %v1942 = vunpack.c.l.b16 %v1762
    %v1943 = vunpack.c.l.b16 %v1763
    %v1944 = vunpack.c.h.b16 %v1763
    %v1945 = vunpack.c.l.b16 %v1764
    %v1946 = vunpack.c.h.b16 %v1764
    %v1947 = vunpack.c.l.b16 %v1765
    %v1948 = vunpack.c.h.b16 %v1765
    %v1949 = vunpack.c.l.b16 %v1766
    %v1950 = vunpack.c.l.b16 %v1767
    %v1951 = vunpack.c.h.b16 %v1767
    %v1952 = vunpack.c.l.b16 %v1768
    %v1953 = vunpack.c.h.b16 %v1768
    %v1954 = vunpack.c.l.b16 %v1769
    %v1955 = vunpack.c.h.b16 %v1769
    %v1956 = vunpack.c.l.b16 %v1770
    %v1957 = vunpack.c.l.b16 %v1771
    %v1958 = vunpack.c.h.b16 %v1771
    %v1959 = vunpack.c.l.b16 %v1772
    %v1960 = vunpack.c.h.b16 %v1772
    %v1961 = vunpack.c.l.b16 %v1773
    %v1962 = vunpack.c.h.b16 %v1773
    %v1963 = vunpack.c.l.b16 %v1774
    %v1964 = vunpack.c.l.b16 %v1775
    %v1965 = vunpack.c.h.b16 %v1775
    %v1966 = vunpack.c.l.b16 %v1776
    %v1967 = vunpack.c.h.b16 %v1776
    %v1968 = vunpack.c.l.b16 %v1777
    %v1969 = vunpack.c.h.b16 %v1777
    %v1970 = vunpack.c.l.b16 %v1778
    %v1971 = vunpack.c.l.b16 %v1779
    %v1972 = vunpack.c.h.b16 %v1779
    %v1973 = vunpack.c.l.b16 %v1780
    %v1974 = vunpack.c.h.b16 %v1780
    %v1975 = vunpack.c.l.b16 %v1781
    %v1976 = vunpack.c.h.b16 %v1781
    %v1977 = vunpack.c.l.b16 %v1782
    %v1978 = vunpack.c.l.b16 %v1783
    %v1979 = vunpack.c.h.b16 %v1783
    %v1980 = vunpack.c.l.b16 %v1784
    %v1981 = vunpack.c.h.b16 %v1784
    %v1982 = vunpack.c.l.b16 %v1785
    %v1983 = vunpack.c.h.b16 %v1785
    %v1984 = vunpack.c.l.b16 %v1786
    %v1985 = vunpack.c.l.b16 %v1787
    %v1986 = vunpack.c.h.b16 %v1787
    %v1987 = vunpack.c.l.b16 %v1788
    %v1988 = vunpack.c.h.b16 %v1788
    %v1989 = vunpack.c.l.b16 %v1789
    %v1990 = vunpack.c.h.b16 %v1789
    %v1991 = vunpack.c.l.b16 %v1790
    %v1992 = vunpack.c.l.b16 %v1791
    %v1993 = vunpack.c.h.b16 %v1791
    %v1994 = vunpack.c.l.b16 %v1792
    %v1995 = vunpack.c.h.b16 %v1792
    %v1996 = vunpack.c.l.b16 %v1793
    %v1997 = vunpack.c.h.b16 %v1793
    %v1998 = vunpack.c.l.b16 %v1794
    %v1999 = vunpack.c.l.b16 %v1795
    %v2000 = vunpack.c.h.b16 %v1795
    %v2001 = vunpack.c.l.b16 %v1796
    %v2002 = vunpack.c.h.b16 %v1796
    %v2003 = vunpack.c.l.b16 %v1797
    %v2004 = vunpack.c.h.b16 %v1797
    %v2005 = vunpack.c.l.b16 %v1798
    %v2006 = vunpack.c.l.b16 %v1799
    %v2007 = vunpack.c.h.b16 %v1799
    %v2008 = vunpack.c.l.b16 %v1800
    %v2009 = vunpack.c.h.b16 %v1800
    %v2010 = vunpack.c.l.b16 %v1801
    %v2011 = vunpack.c.h.b16 %v1801
    %v2012 = vunpack.c.l.b16 %v1802
    %v2013 = vunpack.c.l.b16 %v1803
    %v2014 = vunpack.c.h.b16 %v1803
    %v2015 = vunpack.c.l.b16 %v1804
    %v2016 = vunpack.c.h.b16 %v1804
    %v2017 = vunpack.c.l.b16 %v1805
    %v2018 = vunpack.c.h.b16 %v1805
    %v2019 = vunpack.c.l.b16 %v1806
    %v2020 = vpack.c.b16 %v1915, %v1908
    %v2021 = vpack.c.b16 %v1916, %v1909
    %v2022 = vpack.c.b16 %v1917, %v1910
    %v2023 = vpack.c.b16 %v1918, %v1911
    %v2024 = vpack.c.b16 %v1919, %v1912
    %v2025 = vpack.c.b16 %v1920, %v1913
    %v2026 = vpack.c.b16 %v1921, %v1914
    %v2027 = vpack.c.b16 %v1929, %v1922
    %v2028 = vpack.c.b16 %v1930, %v1923
    %v2029 = vpack.c.b16 %v1931, %v1924
    %v2030 = vpack.c.b16 %v1932, %v1925
    %v2031 = vpack.c.b16 %v1933, %v1926
    %v2032 = vpack.c.b16 %v1934, %v1927
    %v2033 = vpack.c.b16 %v1935, %v1928
    %v2034 = vpack.c.b16 %v1943, %v1936
    %v2035 = vpack.c.b16 %v1944, %v1937
    %v2036 = vpack.c.b16 %v1945, %v1938
    %v2037 = vpack.c.b16 %v1946, %v1939
    %v2038 = vpack.c.b16 %v1947, %v1940
    %v2039 = vpack.c.b16 %v1948, %v1941
    %v2040 = vpack.c.b16 %v1949, %v1942
    %v2041 = vpack.c.b16 %v1957, %v1950
    %v2042 = vpack.c.b16 %v1958, %v1951
    %v2043 = vpack.c.b16 %v1959, %v1952
    %v2044 = vpack.c.b16 %v1960, %v1953
    %v2045 = vpack.c.b16 %v1961, %v1954
    %v2046 = vpack.c.b16 %v1962, %v1955
    %v2047 = vpack.c.b16 %v1963, %v1956
    %v2048 = vpack.c.b16 %v1971, %v1964
    %v2049 = vpack.c.b16 %v1972, %v1965
    %v2050 = vpack.c.b16 %v1973, %v1966
    %v2051 = vpack.c.b16 %v1974, %v1967
    %v2052 = vpack.c.b16 %v1975, %v1968
    %v2053 = vpack.c.b16 %v1976, %v1969
    %v2054 = vpack.c.b16 %v1977, %v1970
    %v2055 = vpack.c.b16 %v1985, %v1978
    %v2056 = vpack.c.b16 %v1986, %v1979
    %v2057 = vpack.c.b16 %v1987, %v1980
    %v2058 = vpack.c.b16 %v1988, %v1981
    %v2059 = vpack.c.b16 %v1989, %v1982
    %v2060 = vpack.c.b16 %v1990, %v1983
    %v2061 = vpack.c.b16 %v1991, %v1984
    %v2062 = vpack.c.b16 %v1999, %v1992
    %v2063 = vpack.c.b16 %v2000, %v1993
    %v2064 = vpack.c.b16 %v2001, %v1994
    %v2065 = vpack.c.b16 %v2002, %v1995
    %v2066 = vpack.c.b16 %v2003, %v1996
    %v2067 = vpack.c.b16 %v2004, %v1997
    %v2068 = vpack.c.b16 %v2005, %v1998
    %v2069 = vpack.c.b16 %v2013, %v2006
    %v2070 = vpack.c.b16 %v2014, %v2007
    %v2071 = vpack.c.b16 %v2015, %v2008
    %v2072 = vpack.c.b16 %v2016, %v2009
    %v2073 = vpack.c.b16 %v2017, %v2010
    %v2074 = vpack.c.b16 %v2018, %v2011
    %v2075 = vpack.c.b16 %v2019, %v2012
    %2132 = vmatprep.subr.bf16.mxu0 %v2021
    %2133 = vmatpush1.bf16.msra.mxu0 %v2020
    %2134 = vmatprep.subr.bf16.mxu0 %v2028
    %2135 = vmatpush1.bf16.msra.mxu0 %v2027
    %2136 = vmatprep.subr.bf16.mxu0 %v2035
    %2137 = vmatpush1.bf16.msra.mxu0 %v2034
    %2138 = vmatprep.subr.bf16.mxu0 %v2042
    %2139 = vmatpush1.bf16.msra.mxu0 %v2041
    %2140 = vmatprep.subr.bf16.mxu0 %v2049
    %2141 = vmatpush1.bf16.msra.mxu0 %v2048
    %2142 = vmatprep.subr.bf16.mxu0 %v2056
    %2143 = vmatpush1.bf16.msra.mxu0 %v2055
    %2144 = vmatprep.subr.bf16.mxu0 %v2063
    %2145 = vmatpush1.bf16.msra.mxu0 %v2062
    %2146 = vmatprep.subr.bf16.mxu0 %v2070
    %2147 = vmatpush1.bf16.msra.mxu0 %v2069
    %2148 = vmatprep.subr.bf16.mxu0 0
    %2149 = vmatpush1.bf16.msra.mxu0 0
    %2150 = vmatprep.subr.bf16.mxu0 0
    %2151 = vmatpush1.bf16.msra.mxu0 0
    %2152 = vmatprep.subr.bf16.mxu0 0
    %2153 = vmatpush1.bf16.msra.mxu0 0
    %2154 = vmatprep.subr.bf16.mxu0 0
    %2155 = vmatpush1.bf16.msra.mxu0 0
    %2156 = vmatprep.subr.bf16.mxu0 0
    %2157 = vmatpush1.bf16.msra.mxu0 0
    %2158 = vmatprep.subr.bf16.mxu0 0
    %2159 = vmatpush1.bf16.msra.mxu0 0
    %2160 = vmatprep.subr.bf16.mxu0 0
    %2161 = vmatpush1.bf16.msra.mxu0 0
    %2162 = vmatprep.subr.bf16.mxu0 0
    %2163 = vmatpush1.bf16.msra.mxu0 0
    %2164 = vmatprep.mubr.bf16.mxu0 0
    %2165 = vmatmul.mubr.bf16.gmra.mrb[0].mxu0 %v1736
    %v2166 = vpop.f32.mrb[0].mxu0
    %v2167 = vadd.f32 %v1812, %v2166
    %v2168 = vpop.f32.mrb[0].mxu0
    %v2169 = vadd.f32 %v1816, %v2168
    %v2170 = vpop.f32.mrb[0].mxu0
    %v2171 = vadd.f32 %v1812, %v2170
    %v2172 = vpop.f32.mrb[0].mxu0
    %v2173 = vadd.f32 %v1816, %v2172
    %2174 = vmatprep.mubr.bf16.mxu0 0
    %2175 = vmatmul.mubr.bf16.gmra.mrb[0].mxu0 %v1737
    %v2176 = vpop.f32.mrb[0].mxu0
    %v2177 = vadd.f32 %v1812, %v2176
    %v2178 = vpop.f32.mrb[0].mxu0
    %v2179 = vadd.f32 %v1816, %v2178
    %v2180 = vpop.f32.mrb[0].mxu0
    %v2181 = vadd.f32 %v1812, %v2180
    %v2182 = vpop.f32.mrb[0].mxu0
    %v2183 = vadd.f32 %v1816, %v2182
    %2184 = vmatprep.mubr.bf16.mxu0 0
    %2185 = vmatmul.mubr.bf16.gmra.mrb[0].mxu0 %v1738
    %v2186 = vpop.f32.mrb[0].mxu0
    %v2187 = vadd.f32 %v1812, %v2186
    %v2188 = vpop.f32.mrb[0].mxu0
    %v2189 = vadd.f32 %v1816, %v2188
    %v2190 = vpop.f32.mrb[0].mxu0
    %v2191 = vadd.f32 %v1812, %v2190
    %v2192 = vpop.f32.mrb[0].mxu0
    %v2193 = vadd.f32 %v1816, %v2192
    %2194 = vmatprep.mubr.bf16.mxu0 0
    %2195 = vmatmul.mubr.bf16.gmra.mrb[0].mxu0 %v1739
    %v2196 = vpop.f32.mrb[0].mxu0
    %v2197 = vadd.f32 %v1812, %v2196
    %v2198 = vpop.f32.mrb[0].mxu0
    %v2199 = vadd.f32 %v1816, %v2198
    %v2200 = vpop.f32.mrb[0].mxu0
    %v2201 = vadd.f32 %v1812, %v2200
    %v2202 = vpop.f32.mrb[0].mxu0
    %v2203 = vadd.f32 %v1816, %v2202
    %2204 = vmatprep.mubr.bf16.mxu0 0
    %2205 = vmatmul.mubr.bf16.gmra.mrb[0].mxu0 %v1740
    %v2206 = vpop.f32.mrb[0].mxu0
    %v2207 = vadd.f32 %v1812, %v2206
    %v2208 = vpop.f32.mrb[0].mxu0
    %v2209 = vadd.f32 %v1816, %v2208
    %v2210 = vpop.f32.mrb[0].mxu0
    %v2211 = vadd.f32 %v1812, %v2210
    %v2212 = vpop.f32.mrb[0].mxu0
    %v2213 = vadd.f32 %v1816, %v2212
    %2214 = vmatprep.mubr.bf16.mxu0 0
    %2215 = vmatmul.mubr.bf16.gmra.mrb[0].mxu0 %v1741
    %v2216 = vpop.f32.mrb[0].mxu0
    %v2217 = vadd.f32 %v1812, %v2216
    %v2218 = vpop.f32.mrb[0].mxu0
    %v2219 = vadd.f32 %v1816, %v2218
    %v2220 = vpop.f32.mrb[0].mxu0
    %v2221 = vadd.f32 %v1812, %v2220
    %v2222 = vpop.f32.mrb[0].mxu0
    %v2223 = vadd.f32 %v1816, %v2222
    %2224 = vmatprep.mubr.bf16.mxu0 0
    %2225 = vmatmul.mubr.bf16.gmra.mrb[0].mxu0 %v1742
    %v2226 = vpop.f32.mrb[0].mxu0
    %v2227 = vadd.f32 %v1812, %v2226
    %v2228 = vpop.f32.mrb[0].mxu0
    %v2229 = vadd.f32 %v1816, %v2228
    %v2230 = vpop.f32.mrb[0].mxu0
    %v2231 = vadd.f32 %v1812, %v2230
    %v2232 = vpop.f32.mrb[0].mxu0
    %v2233 = vadd.f32 %v1816, %v2232
    %2234 = vdwg.mxu0
    %2235 = vmatprep.subr.bf16.mxu0 %v2023
    %2236 = vmatpush1.bf16.msra.mxu0 %v2022
    %2237 = vmatprep.subr.bf16.mxu0 %v2030
    %2238 = vmatpush1.bf16.msra.mxu0 %v2029
    %2239 = vmatprep.subr.bf16.mxu0 %v2037
    %2240 = vmatpush1.bf16.msra.mxu0 %v2036
    %2241 = vmatprep.subr.bf16.mxu0 %v2044
    %2242 = vmatpush1.bf16.msra.mxu0 %v2043
    %2243 = vmatprep.subr.bf16.mxu0 %v2051
    %2244 = vmatpush1.bf16.msra.mxu0 %v2050
    %2245 = vmatprep.subr.bf16.mxu0 %v2058
    %2246 = vmatpush1.bf16.msra.mxu0 %v2057
    %2247 = vmatprep.subr.bf16.mxu0 %v2065
    %2248 = vmatpush1.bf16.msra.mxu0 %v2064
    %2249 = vmatprep.subr.bf16.mxu0 %v2072
    %2250 = vmatpush1.bf16.msra.mxu0 %v2071
    %2251 = vmatprep.subr.bf16.mxu0 0
    %2252 = vmatpush1.bf16.msra.mxu0 0
    %2253 = vmatprep.subr.bf16.mxu0 0
    %2254 = vmatpush1.bf16.msra.mxu0 0
    %2255 = vmatprep.subr.bf16.mxu0 0
    %2256 = vmatpush1.bf16.msra.mxu0 0
    %2257 = vmatprep.subr.bf16.mxu0 0
    %2258 = vmatpush1.bf16.msra.mxu0 0
    %2259 = vmatprep.subr.bf16.mxu0 0
    %2260 = vmatpush1.bf16.msra.mxu0 0
    %2261 = vmatprep.subr.bf16.mxu0 0
    %2262 = vmatpush1.bf16.msra.mxu0 0
    %2263 = vmatprep.subr.bf16.mxu0 0
    %2264 = vmatpush1.bf16.msra.mxu0 0
    %2265 = vmatprep.subr.bf16.mxu0 0
    %2266 = vmatpush1.bf16.msra.mxu0 0
    %2267 = vmatprep.mubr.bf16.mxu0 0
    %2268 = vmatmul.mubr.bf16.gmra.mrb[0].mxu0 %v1736
    %v2269 = vpop.f32.mrb[0].mxu0
    %v2270 = vadd.f32 %v1820, %v2269
    %v2271 = vpop.f32.mrb[0].mxu0
    %v2272 = vadd.f32 %v1824, %v2271
    %v2273 = vpop.f32.mrb[0].mxu0
    %v2274 = vadd.f32 %v1820, %v2273
    %v2275 = vpop.f32.mrb[0].mxu0
    %v2276 = vadd.f32 %v1824, %v2275
    %2277 = vmatprep.mubr.bf16.mxu0 0
    %2278 = vmatmul.mubr.bf16.gmra.mrb[0].mxu0 %v1737
    %v2279 = vpop.f32.mrb[0].mxu0
    %v2280 = vadd.f32 %v1820, %v2279
    %v2281 = vpop.f32.mrb[0].mxu0
    %v2282 = vadd.f32 %v1824, %v2281
    %v2283 = vpop.f32.mrb[0].mxu0
    %v2284 = vadd.f32 %v1820, %v2283
    %v2285 = vpop.f32.mrb[0].mxu0
    %v2286 = vadd.f32 %v1824, %v2285
    %2287 = vmatprep.mubr.bf16.mxu0 0
    %2288 = vmatmul.mubr.bf16.gmra.mrb[0].mxu0 %v1738
    %v2289 = vpop.f32.mrb[0].mxu0
    %v2290 = vadd.f32 %v1820, %v2289
    %v2291 = vpop.f32.mrb[0].mxu0
    %v2292 = vadd.f32 %v1824, %v2291
    %v2293 = vpop.f32.mrb[0].mxu0
    %v2294 = vadd.f32 %v1820, %v2293
    %v2295 = vpop.f32.mrb[0].mxu0
    %v2296 = vadd.f32 %v1824, %v2295
    %2297 = vmatprep.mubr.bf16.mxu0 0
    %2298 = vmatmul.mubr.bf16.gmra.mrb[0].mxu0 %v1739
    %v2299 = vpop.f32.mrb[0].mxu0
    %v2300 = vadd.f32 %v1820, %v2299
    %v2301 = vpop.f32.mrb[0].mxu0
    %v2302 = vadd.f32 %v1824, %v2301
    %v2303 = vpop.f32.mrb[0].mxu0
    %v2304 = vadd.f32 %v1820, %v2303
    %v2305 = vpop.f32.mrb[0].mxu0
    %v2306 = vadd.f32 %v1824, %v2305
    %2307 = vmatprep.mubr.bf16.mxu0 0
    %2308 = vmatmul.mubr.bf16.gmra.mrb[0].mxu0 %v1740
    %v2309 = vpop.f32.mrb[0].mxu0
    %v2310 = vadd.f32 %v1820, %v2309
    %v2311 = vpop.f32.mrb[0].mxu0
    %v2312 = vadd.f32 %v1824, %v2311
    %v2313 = vpop.f32.mrb[0].mxu0
    %v2314 = vadd.f32 %v1820, %v2313
    %v2315 = vpop.f32.mrb[0].mxu0
    %v2316 = vadd.f32 %v1824, %v2315
    %2317 = vmatprep.mubr.bf16.mxu0 0
    %2318 = vmatmul.mubr.bf16.gmra.mrb[0].mxu0 %v1741
    %v2319 = vpop.f32.mrb[0].mxu0
    %v2320 = vadd.f32 %v1820, %v2319
    %v2321 = vpop.f32.mrb[0].mxu0
    %v2322 = vadd.f32 %v1824, %v2321
    %v2323 = vpop.f32.mrb[0].mxu0
    %v2324 = vadd.f32 %v1820, %v2323
    %v2325 = vpop.f32.mrb[0].mxu0
    %v2326 = vadd.f32 %v1824, %v2325
    %2327 = vmatprep.mubr.bf16.mxu0 0
    %2328 = vmatmul.mubr.bf16.gmra.mrb[0].mxu0 %v1742
    %v2329 = vpop.f32.mrb[0].mxu0
    %v2330 = vadd.f32 %v1820, %v2329
    %v2331 = vpop.f32.mrb[0].mxu0
    %v2332 = vadd.f32 %v1824, %v2331
    %v2333 = vpop.f32.mrb[0].mxu0
    %v2334 = vadd.f32 %v1820, %v2333
    %v2335 = vpop.f32.mrb[0].mxu0
    %v2336 = vadd.f32 %v1824, %v2335
    %2337 = vdwg.mxu0
    %2338 = vmatprep.subr.bf16.mxu0 %v2025
    %2339 = vmatpush1.bf16.msra.mxu0 %v2024
    %2340 = vmatprep.subr.bf16.mxu0 %v2032
    %2341 = vmatpush1.bf16.msra.mxu0 %v2031
    %2342 = vmatprep.subr.bf16.mxu0 %v2039
    %2343 = vmatpush1.bf16.msra.mxu0 %v2038
    %2344 = vmatprep.subr.bf16.mxu0 %v2046
    %2345 = vmatpush1.bf16.msra.mxu0 %v2045
    %2346 = vmatprep.subr.bf16.mxu0 %v2053
    %2347 = vmatpush1.bf16.msra.mxu0 %v2052
    %2348 = vmatprep.subr.bf16.mxu0 %v2060
    %2349 = vmatpush1.bf16.msra.mxu0 %v2059
    %2350 = vmatprep.subr.bf16.mxu0 %v2067
    %2351 = vmatpush1.bf16.msra.mxu0 %v2066
    %2352 = vmatprep.subr.bf16.mxu0 %v2074
    %2353 = vmatpush1.bf16.msra.mxu0 %v2073
    %2354 = vmatprep.subr.bf16.mxu0 0
    %2355 = vmatpush1.bf16.msra.mxu0 0
    %2356 = vmatprep.subr.bf16.mxu0 0
    %2357 = vmatpush1.bf16.msra.mxu0 0
    %2358 = vmatprep.subr.bf16.mxu0 0
    %2359 = vmatpush1.bf16.msra.mxu0 0
    %2360 = vmatprep.subr.bf16.mxu0 0
    %2361 = vmatpush1.bf16.msra.mxu0 0
    %2362 = vmatprep.subr.bf16.mxu0 0
    %2363 = vmatpush1.bf16.msra.mxu0 0
    %2364 = vmatprep.subr.bf16.mxu0 0
    %2365 = vmatpush1.bf16.msra.mxu0 0
    %2366 = vmatprep.subr.bf16.mxu0 0
    %2367 = vmatpush1.bf16.msra.mxu0 0
    %2368 = vmatprep.subr.bf16.mxu0 0
    %2369 = vmatpush1.bf16.msra.mxu0 0
    %2370 = vmatprep.mubr.bf16.mxu0 0
    %2371 = vmatmul.mubr.bf16.gmra.mrb[0].mxu0 %v1736
    %v2372 = vpop.f32.mrb[0].mxu0
    %v2373 = vadd.f32 %v1828, %v2372
    %v2374 = vpop.f32.mrb[0].mxu0
    %v2375 = vadd.f32 %v1832, %v2374
    %v2376 = vpop.f32.mrb[0].mxu0
    %v2377 = vadd.f32 %v1828, %v2376
    %v2378 = vpop.f32.mrb[0].mxu0
    %v2379 = vadd.f32 %v1832, %v2378
    %2380 = vmatprep.mubr.bf16.mxu0 0
    %2381 = vmatmul.mubr.bf16.gmra.mrb[0].mxu0 %v1737
    %v2382 = vpop.f32.mrb[0].mxu0
    %v2383 = vadd.f32 %v1828, %v2382
    %v2384 = vpop.f32.mrb[0].mxu0
    %v2385 = vadd.f32 %v1832, %v2384
    %v2386 = vpop.f32.mrb[0].mxu0
    %v2387 = vadd.f32 %v1828, %v2386
    %v2388 = vpop.f32.mrb[0].mxu0
    %v2389 = vadd.f32 %v1832, %v2388
    %2390 = vmatprep.mubr.bf16.mxu0 0
    %2391 = vmatmul.mubr.bf16.gmra.mrb[0].mxu0 %v1738
    %v2392 = vpop.f32.mrb[0].mxu0
    %v2393 = vadd.f32 %v1828, %v2392
    %v2394 = vpop.f32.mrb[0].mxu0
    %v2395 = vadd.f32 %v1832, %v2394
    %v2396 = vpop.f32.mrb[0].mxu0
    %v2397 = vadd.f32 %v1828, %v2396
    %v2398 = vpop.f32.mrb[0].mxu0
    %v2399 = vadd.f32 %v1832, %v2398
    %2400 = vmatprep.mubr.bf16.mxu0 0
    %2401 = vmatmul.mubr.bf16.gmra.mrb[0].mxu0 %v1739
    %v2402 = vpop.f32.mrb[0].mxu0
    %v2403 = vadd.f32 %v1828, %v2402
    %v2404 = vpop.f32.mrb[0].mxu0
    %v2405 = vadd.f32 %v1832, %v2404
    %v2406 = vpop.f32.mrb[0].mxu0
    %v2407 = vadd.f32 %v1828, %v2406
    %v2408 = vpop.f32.mrb[0].mxu0
    %v2409 = vadd.f32 %v1832, %v2408
    %2410 = vmatprep.mubr.bf16.mxu0 0
    %2411 = vmatmul.mubr.bf16.gmra.mrb[0].mxu0 %v1740
    %v2412 = vpop.f32.mrb[0].mxu0
    %v2413 = vadd.f32 %v1828, %v2412
    %v2414 = vpop.f32.mrb[0].mxu0
    %v2415 = vadd.f32 %v1832, %v2414
    %v2416 = vpop.f32.mrb[0].mxu0
    %v2417 = vadd.f32 %v1828, %v2416
    %v2418 = vpop.f32.mrb[0].mxu0
    %v2419 = vadd.f32 %v1832, %v2418
    %2420 = vmatprep.mubr.bf16.mxu0 0
    %2421 = vmatmul.mubr.bf16.gmra.mrb[0].mxu0 %v1741
    %v2422 = vpop.f32.mrb[0].mxu0
    %v2423 = vadd.f32 %v1828, %v2422
    %v2424 = vpop.f32.mrb[0].mxu0
    %v2425 = vadd.f32 %v1832, %v2424
    %v2426 = vpop.f32.mrb[0].mxu0
    %v2427 = vadd.f32 %v1828, %v2426
    %v2428 = vpop.f32.mrb[0].mxu0
    %v2429 = vadd.f32 %v1832, %v2428
    %2430 = vmatprep.mubr.bf16.mxu0 0
    %2431 = vmatmul.mubr.bf16.gmra.mrb[0].mxu0 %v1742
    %v2432 = vpop.f32.mrb[0].mxu0
    %v2433 = vadd.f32 %v1828, %v2432
    %v2434 = vpop.f32.mrb[0].mxu0
    %v2435 = vadd.f32 %v1832, %v2434
    %v2436 = vpop.f32.mrb[0].mxu0
    %v2437 = vadd.f32 %v1828, %v2436
    %v2438 = vpop.f32.mrb[0].mxu0
    %v2439 = vadd.f32 %v1832, %v2438
    %2440 = vdwg.mxu0
    %2441 = vmatprep.subr.bf16.mxu0 0
    %2442 = vmatpush1.bf16.msra.mxu0 %v2026
    %2443 = vmatprep.subr.bf16.mxu0 0
    %2444 = vmatpush1.bf16.msra.mxu0 %v2033
    %2445 = vmatprep.subr.bf16.mxu0 0
    %2446 = vmatpush1.bf16.msra.mxu0 %v2040
    %2447 = vmatprep.subr.bf16.mxu0 0
    %2448 = vmatpush1.bf16.msra.mxu0 %v2047
    %2449 = vmatprep.subr.bf16.mxu0 0
    %2450 = vmatpush1.bf16.msra.mxu0 %v2054
    %2451 = vmatprep.subr.bf16.mxu0 0
    %2452 = vmatpush1.bf16.msra.mxu0 %v2061
    %2453 = vmatprep.subr.bf16.mxu0 0
    %2454 = vmatpush1.bf16.msra.mxu0 %v2068
    %2455 = vmatprep.subr.bf16.mxu0 0
    %2456 = vmatpush1.bf16.msra.mxu0 %v2075
    %2457 = vmatprep.subr.bf16.mxu0 0
    %2458 = vmatpush1.bf16.msra.mxu0 0
    %2459 = vmatprep.subr.bf16.mxu0 0
    %2460 = vmatpush1.bf16.msra.mxu0 0
    %2461 = vmatprep.subr.bf16.mxu0 0
    %2462 = vmatpush1.bf16.msra.mxu0 0
    %2463 = vmatprep.subr.bf16.mxu0 0
    %2464 = vmatpush1.bf16.msra.mxu0 0
    %2465 = vmatprep.subr.bf16.mxu0 0
    %2466 = vmatpush1.bf16.msra.mxu0 0
    %2467 = vmatprep.subr.bf16.mxu0 0
    %2468 = vmatpush1.bf16.msra.mxu0 0
    %2469 = vmatprep.subr.bf16.mxu0 0
    %2470 = vmatpush1.bf16.msra.mxu0 0
    %2471 = vmatprep.subr.bf16.mxu0 0
    %2472 = vmatpush1.bf16.msra.mxu0 0
    %2473 = vmatprep.mubr.bf16.mxu0 0
    %2474 = vmatmul.mubr.bf16.gmra.mrb[0].mxu0 %v1736
    %v2475 = vpop.f32.mrb[0].mxu0
    %v2476 = vadd.f32 %v1836, %v2475
    %v2477 = vpop.f32.mrb[0].mxu0
    %v2478 = vpop.f32.mrb[0].mxu0
    %v2479 = vadd.f32 %v1836, %v2478
    %v2480 = vpop.f32.mrb[0].mxu0
    %2481 = vmatprep.mubr.bf16.mxu0 0
    %2482 = vmatmul.mubr.bf16.gmra.mrb[0].mxu0 %v1737
    %v2483 = vpop.f32.mrb[0].mxu0
    %v2484 = vadd.f32 %v1836, %v2483
    %v2485 = vpop.f32.mrb[0].mxu0
    %v2486 = vpop.f32.mrb[0].mxu0
    %v2487 = vadd.f32 %v1836, %v2486
    %v2488 = vpop.f32.mrb[0].mxu0
    %2489 = vmatprep.mubr.bf16.mxu0 0
    %2490 = vmatmul.mubr.bf16.gmra.mrb[0].mxu0 %v1738
    %v2491 = vpop.f32.mrb[0].mxu0
    %v2492 = vadd.f32 %v1836, %v2491
    %v2493 = vpop.f32.mrb[0].mxu0
    %v2494 = vpop.f32.mrb[0].mxu0
    %v2495 = vadd.f32 %v1836, %v2494
    %v2496 = vpop.f32.mrb[0].mxu0
    %2497 = vmatprep.mubr.bf16.mxu0 0
    %2498 = vmatmul.mubr.bf16.gmra.mrb[0].mxu0 %v1739
    %v2499 = vpop.f32.mrb[0].mxu0
    %v2500 = vadd.f32 %v1836, %v2499
    %v2501 = vpop.f32.mrb[0].mxu0
    %v2502 = vpop.f32.mrb[0].mxu0
    %v2503 = vadd.f32 %v1836, %v2502
    %v2504 = vpop.f32.mrb[0].mxu0
    %2505 = vmatprep.mubr.bf16.mxu0 0
    %2506 = vmatmul.mubr.bf16.gmra.mrb[0].mxu0 %v1740
    %v2507 = vpop.f32.mrb[0].mxu0
    %v2508 = vadd.f32 %v1836, %v2507
    %v2509 = vpop.f32.mrb[0].mxu0
    %v2510 = vpop.f32.mrb[0].mxu0
    %v2511 = vadd.f32 %v1836, %v2510
    %v2512 = vpop.f32.mrb[0].mxu0
    %2513 = vmatprep.mubr.bf16.mxu0 0
    %2514 = vmatmul.mubr.bf16.gmra.mrb[0].mxu0 %v1741
    %v2515 = vpop.f32.mrb[0].mxu0
    %v2516 = vadd.f32 %v1836, %v2515
    %v2517 = vpop.f32.mrb[0].mxu0
    %v2518 = vpop.f32.mrb[0].mxu0
    %v2519 = vadd.f32 %v1836, %v2518
    %v2520 = vpop.f32.mrb[0].mxu0
    %2521 = vmatprep.mubr.bf16.mxu0 0
    %2522 = vmatmul.mubr.bf16.gmra.mrb[0].mxu0 %v1742
    %v2523 = vpop.f32.mrb[0].mxu0
    %v2524 = vadd.f32 %v1836, %v2523
    %v2525 = vpop.f32.mrb[0].mxu0
    %v2526 = vpop.f32.mrb[0].mxu0
    %v2527 = vadd.f32 %v1836, %v2526
    %v2528 = vpop.f32.mrb[0].mxu0
    %2529 = vdwg.mxu0
    %v2530 = vsub.f32 0.0, %v2167
    %v2531 = vsub.f32 0.0, %v2169
    %v2532 = vsub.f32 0.0, %v2270
    %v2533 = vsub.f32 0.0, %v2272
    %v2534 = vsub.f32 0.0, %v2373
    %v2535 = vsub.f32 0.0, %v2375
    %v2536 = vsub.f32 0.0, %v2476
    %v2537 = vsub.f32 0.0, %v2171
    %v2538 = vsub.f32 0.0, %v2173
    %v2539 = vsub.f32 0.0, %v2274
    %v2540 = vsub.f32 0.0, %v2276
    %v2541 = vsub.f32 0.0, %v2377
    %v2542 = vsub.f32 0.0, %v2379
    %v2543 = vsub.f32 0.0, %v2479
    %v2544 = vsub.f32 0.0, %v2177
    %v2545 = vsub.f32 0.0, %v2179
    %v2546 = vsub.f32 0.0, %v2280
    %v2547 = vsub.f32 0.0, %v2282
    %v2548 = vsub.f32 0.0, %v2383
    %v2549 = vsub.f32 0.0, %v2385
    %v2550 = vsub.f32 0.0, %v2484
    %v2551 = vsub.f32 0.0, %v2181
    %v2552 = vsub.f32 0.0, %v2183
    %v2553 = vsub.f32 0.0, %v2284
    %v2554 = vsub.f32 0.0, %v2286
    %v2555 = vsub.f32 0.0, %v2387
    %v2556 = vsub.f32 0.0, %v2389
    %v2557 = vsub.f32 0.0, %v2487
    %v2558 = vsub.f32 0.0, %v2187
    %v2559 = vsub.f32 0.0, %v2189
    %v2560 = vsub.f32 0.0, %v2290
    %v2561 = vsub.f32 0.0, %v2292
    %v2562 = vsub.f32 0.0, %v2393
    %v2563 = vsub.f32 0.0, %v2395
    %v2564 = vsub.f32 0.0, %v2492
    %v2565 = vsub.f32 0.0, %v2191
    %v2566 = vsub.f32 0.0, %v2193
    %v2567 = vsub.f32 0.0, %v2294
    %v2568 = vsub.f32 0.0, %v2296
    %v2569 = vsub.f32 0.0, %v2397
    %v2570 = vsub.f32 0.0, %v2399
    %v2571 = vsub.f32 0.0, %v2495
    %v2572 = vsub.f32 0.0, %v2197
    %v2573 = vsub.f32 0.0, %v2199
    %v2574 = vsub.f32 0.0, %v2300
    %v2575 = vsub.f32 0.0, %v2302
    %v2576 = vsub.f32 0.0, %v2403
    %v2577 = vsub.f32 0.0, %v2405
    %v2578 = vsub.f32 0.0, %v2500
    %v2579 = vsub.f32 0.0, %v2201
    %v2580 = vsub.f32 0.0, %v2203
    %v2581 = vsub.f32 0.0, %v2304
    %v2582 = vsub.f32 0.0, %v2306
    %v2583 = vsub.f32 0.0, %v2407
    %v2584 = vsub.f32 0.0, %v2409
    %v2585 = vsub.f32 0.0, %v2503
    %v2586 = vsub.f32 0.0, %v2207
    %v2587 = vsub.f32 0.0, %v2209
    %v2588 = vsub.f32 0.0, %v2310
    %v2589 = vsub.f32 0.0, %v2312
    %v2590 = vsub.f32 0.0, %v2413
    %v2591 = vsub.f32 0.0, %v2415
    %v2592 = vsub.f32 0.0, %v2508
    %v2593 = vsub.f32 0.0, %v2211
    %v2594 = vsub.f32 0.0, %v2213
    %v2595 = vsub.f32 0.0, %v2314
    %v2596 = vsub.f32 0.0, %v2316
    %v2597 = vsub.f32 0.0, %v2417
    %v2598 = vsub.f32 0.0, %v2419
    %v2599 = vsub.f32 0.0, %v2511
    %v2600 = vsub.f32 0.0, %v2217
    %v2601 = vsub.f32 0.0, %v2219
    %v2602 = vsub.f32 0.0, %v2320
    %v2603 = vsub.f32 0.0, %v2322
    %v2604 = vsub.f32 0.0, %v2423
    %v2605 = vsub.f32 0.0, %v2425
    %v2606 = vsub.f32 0.0, %v2516
    %v2607 = vsub.f32 0.0, %v2221
    %v2608 = vsub.f32 0.0, %v2223
    %v2609 = vsub.f32 0.0, %v2324
    %v2610 = vsub.f32 0.0, %v2326
    %v2611 = vsub.f32 0.0, %v2427
    %v2612 = vsub.f32 0.0, %v2429
    %v2613 = vsub.f32 0.0, %v2519
    %v2614 = vsub.f32 0.0, %v2227
    %v2615 = vsub.f32 0.0, %v2229
    %v2616 = vsub.f32 0.0, %v2330
    %v2617 = vsub.f32 0.0, %v2332
    %v2618 = vsub.f32 0.0, %v2433
    %v2619 = vsub.f32 0.0, %v2435
    %v2620 = vsub.f32 0.0, %v2524
    %v2621 = vsub.f32 0.0, %v2231
    %v2622 = vsub.f32 0.0, %v2233
    %v2623 = vsub.f32 0.0, %v2334
    %v2624 = vsub.f32 0.0, %v2336
    %v2625 = vsub.f32 0.0, %v2437
    %v2626 = vsub.f32 0.0, %v2439
    %v2627 = vsub.f32 0.0, %v2527
    %v2628 = vmul.f32 %v2530, 1.442695
    %v2629 = vpow.pop %v2628
    %v2630 = vmul.f32 %v2531, 1.442695
    %v2631 = vpow.pop %v2630
    %v2632 = vmul.f32 %v2532, 1.442695
    %v2633 = vpow.pop %v2632
    %v2634 = vmul.f32 %v2533, 1.442695
    %v2635 = vpow.pop %v2634
    %v2636 = vmul.f32 %v2534, 1.442695
    %v2637 = vpow.pop %v2636
    %v2638 = vmul.f32 %v2535, 1.442695
    %v2639 = vpow.pop %v2638
    %v2640 = vmul.f32 %v2536, 1.442695
    %v2641 = vpow.pop %v2640
    %v2642 = vmul.f32 %v2537, 1.442695
    %v2643 = vpow.pop %v2642
    %v2644 = vmul.f32 %v2538, 1.442695
    %v2645 = vpow.pop %v2644
    %v2646 = vmul.f32 %v2539, 1.442695
    %v2647 = vpow.pop %v2646
    %v2648 = vmul.f32 %v2540, 1.442695
    %v2649 = vpow.pop %v2648
    %v2650 = vmul.f32 %v2541, 1.442695
    %v2651 = vpow.pop %v2650
    %v2652 = vmul.f32 %v2542, 1.442695
    %v2653 = vpow.pop %v2652
    %v2654 = vmul.f32 %v2543, 1.442695
    %v2655 = vpow.pop %v2654
    %v2656 = vmul.f32 %v2544, 1.442695
    %v2657 = vpow.pop %v2656
    %v2658 = vmul.f32 %v2545, 1.442695
    %v2659 = vpow.pop %v2658
    %v2660 = vmul.f32 %v2546, 1.442695
    %v2661 = vpow.pop %v2660
    %v2662 = vmul.f32 %v2547, 1.442695
    %v2663 = vpow.pop %v2662
    %v2664 = vmul.f32 %v2548, 1.442695
    %v2665 = vpow.pop %v2664
    %v2666 = vmul.f32 %v2549, 1.442695
    %v2667 = vpow.pop %v2666
    %v2668 = vmul.f32 %v2550, 1.442695
    %v2669 = vpow.pop %v2668
    %v2670 = vmul.f32 %v2551, 1.442695
    %v2671 = vpow.pop %v2670
    %v2672 = vmul.f32 %v2552, 1.442695
    %v2673 = vpow.pop %v2672
    %v2674 = vmul.f32 %v2553, 1.442695
    %v2675 = vpow.pop %v2674
    %v2676 = vmul.f32 %v2554, 1.442695
    %v2677 = vpow.pop %v2676
    %v2678 = vmul.f32 %v2555, 1.442695
    %v2679 = vpow.pop %v2678
    %v2680 = vmul.f32 %v2556, 1.442695
    %v2681 = vpow.pop %v2680
    %v2682 = vmul.f32 %v2557, 1.442695
    %v2683 = vpow.pop %v2682
    %v2684 = vmul.f32 %v2558, 1.442695
    %v2685 = vpow.pop %v2684
    %v2686 = vmul.f32 %v2559, 1.442695
    %v2687 = vpow.pop %v2686
    %v2688 = vmul.f32 %v2560, 1.442695
    %v2689 = vpow.pop %v2688
    %v2690 = vmul.f32 %v2561, 1.442695
    %v2691 = vpow.pop %v2690
    %v2692 = vmul.f32 %v2562, 1.442695
    %v2693 = vpow.pop %v2692
    %v2694 = vmul.f32 %v2563, 1.442695
    %v2695 = vpow.pop %v2694
    %v2696 = vmul.f32 %v2564, 1.442695
    %v2697 = vpow.pop %v2696
    %v2698 = vmul.f32 %v2565, 1.442695
    %v2699 = vpow.pop %v2698
    %v2700 = vmul.f32 %v2566, 1.442695
    %v2701 = vpow.pop %v2700
    %v2702 = vmul.f32 %v2567, 1.442695
    %v2703 = vpow.pop %v2702
    %v2704 = vmul.f32 %v2568, 1.442695
    %v2705 = vpow.pop %v2704
    %v2706 = vmul.f32 %v2569, 1.442695
    %v2707 = vpow.pop %v2706
    %v2708 = vmul.f32 %v2570, 1.442695
    %v2709 = vpow.pop %v2708
    %v2710 = vmul.f32 %v2571, 1.442695
    %v2711 = vpow.pop %v2710
    %v2712 = vmul.f32 %v2572, 1.442695
    %v2713 = vpow.pop %v2712
    %v2714 = vmul.f32 %v2573, 1.442695
    %v2715 = vpow.pop %v2714
    %v2716 = vmul.f32 %v2574, 1.442695
    %v2717 = vpow.pop %v2716
    %v2718 = vmul.f32 %v2575, 1.442695
    %v2719 = vpow.pop %v2718
    %v2720 = vmul.f32 %v2576, 1.442695
    %v2721 = vpow.pop %v2720
    %v2722 = vmul.f32 %v2577, 1.442695
    %v2723 = vpow.pop %v2722
    %v2724 = vmul.f32 %v2578, 1.442695
    %v2725 = vpow.pop %v2724
    %v2726 = vmul.f32 %v2579, 1.442695
    %v2727 = vpow.pop %v2726
    %v2728 = vmul.f32 %v2580, 1.442695
    %v2729 = vpow.pop %v2728
    %v2730 = vmul.f32 %v2581, 1.442695
    %v2731 = vpow.pop %v2730
    %v2732 = vmul.f32 %v2582, 1.442695
    %v2733 = vpow.pop %v2732
    %v2734 = vmul.f32 %v2583, 1.442695
    %v2735 = vpow.pop %v2734
    %v2736 = vmul.f32 %v2584, 1.442695
    %v2737 = vpow.pop %v2736
    %v2738 = vmul.f32 %v2585, 1.442695
    %v2739 = vpow.pop %v2738
    %v2740 = vmul.f32 %v2586, 1.442695
    %v2741 = vpow.pop %v2740
    %v2742 = vmul.f32 %v2587, 1.442695
    %v2743 = vpow.pop %v2742
    %v2744 = vmul.f32 %v2588, 1.442695
    %v2745 = vpow.pop %v2744
    %v2746 = vmul.f32 %v2589, 1.442695
    %v2747 = vpow.pop %v2746
    %v2748 = vmul.f32 %v2590, 1.442695
    %v2749 = vpow.pop %v2748
    %v2750 = vmul.f32 %v2591, 1.442695
    %v2751 = vpow.pop %v2750
    %v2752 = vmul.f32 %v2592, 1.442695
    %v2753 = vpow.pop %v2752
    %v2754 = vmul.f32 %v2593, 1.442695
    %v2755 = vpow.pop %v2754
    %v2756 = vmul.f32 %v2594, 1.442695
    %v2757 = vpow.pop %v2756
    %v2758 = vmul.f32 %v2595, 1.442695
    %v2759 = vpow.pop %v2758
    %v2760 = vmul.f32 %v2596, 1.442695
    %v2761 = vpow.pop %v2760
    %v2762 = vmul.f32 %v2597, 1.442695
    %v2763 = vpow.pop %v2762
    %v2764 = vmul.f32 %v2598, 1.442695
    %v2765 = vpow.pop %v2764
    %v2766 = vmul.f32 %v2599, 1.442695
    %v2767 = vpow.pop %v2766
    %v2768 = vmul.f32 %v2600, 1.442695
    %v2769 = vpow.pop %v2768
    %v2770 = vmul.f32 %v2601, 1.442695
    %v2771 = vpow.pop %v2770
    %v2772 = vmul.f32 %v2602, 1.442695
    %v2773 = vpow.pop %v2772
    %v2774 = vmul.f32 %v2603, 1.442695
    %v2775 = vpow.pop %v2774
    %v2776 = vmul.f32 %v2604, 1.442695
    %v2777 = vpow.pop %v2776
    %v2778 = vmul.f32 %v2605, 1.442695
    %v2779 = vpow.pop %v2778
    %v2780 = vmul.f32 %v2606, 1.442695
    %v2781 = vpow.pop %v2780
    %v2782 = vmul.f32 %v2607, 1.442695
    %v2783 = vpow.pop %v2782
    %v2784 = vmul.f32 %v2608, 1.442695
    %v2785 = vpow.pop %v2784
    %v2786 = vmul.f32 %v2609, 1.442695
    %v2787 = vpow.pop %v2786
    %v2788 = vmul.f32 %v2610, 1.442695
    %v2789 = vpow.pop %v2788
    %v2790 = vmul.f32 %v2611, 1.442695
    %v2791 = vpow.pop %v2790
    %v2792 = vmul.f32 %v2612, 1.442695
    %v2793 = vpow.pop %v2792
    %v2794 = vmul.f32 %v2613, 1.442695
    %v2795 = vpow.pop %v2794
    %v2796 = vmul.f32 %v2614, 1.442695
    %v2797 = vpow.pop %v2796
    %v2798 = vmul.f32 %v2615, 1.442695
    %v2799 = vpow.pop %v2798
    %v2800 = vmul.f32 %v2616, 1.442695
    %v2801 = vpow.pop %v2800
    %v2802 = vmul.f32 %v2617, 1.442695
    %v2803 = vpow.pop %v2802
    %v2804 = vmul.f32 %v2618, 1.442695
    %v2805 = vpow.pop %v2804
    %v2806 = vmul.f32 %v2619, 1.442695
    %v2807 = vpow.pop %v2806
    %v2808 = vmul.f32 %v2620, 1.442695
    %v2809 = vpow.pop %v2808
    %v2810 = vmul.f32 %v2621, 1.442695
    %v2811 = vpow.pop %v2810
    %v2812 = vmul.f32 %v2622, 1.442695
    %v2813 = vpow.pop %v2812
    %v2814 = vmul.f32 %v2623, 1.442695
    %v2815 = vpow.pop %v2814
    %v2816 = vmul.f32 %v2624, 1.442695
    %v2817 = vpow.pop %v2816
    %v2818 = vmul.f32 %v2625, 1.442695
    %v2819 = vpow.pop %v2818
    %v2820 = vmul.f32 %v2626, 1.442695
    %v2821 = vpow.pop %v2820
    %v2822 = vmul.f32 %v2627, 1.442695
    %v2823 = vpow.pop %v2822
    %v2824 = vadd.f32 %v2629, 1.0
    %v2825 = vadd.f32 %v2631, 1.0
    %v2826 = vadd.f32 %v2633, 1.0
    %v2827 = vadd.f32 %v2635, 1.0
    %v2828 = vadd.f32 %v2637, 1.0
    %v2829 = vadd.f32 %v2639, 1.0
    %v2830 = vadd.f32 %v2641, 1.0
    %v2831 = vadd.f32 %v2643, 1.0
    %v2832 = vadd.f32 %v2645, 1.0
    %v2833 = vadd.f32 %v2647, 1.0
    %v2834 = vadd.f32 %v2649, 1.0
    %v2835 = vadd.f32 %v2651, 1.0
    %v2836 = vadd.f32 %v2653, 1.0
    %v2837 = vadd.f32 %v2655, 1.0
    %v2838 = vadd.f32 %v2657, 1.0
    %v2839 = vadd.f32 %v2659, 1.0
    %v2840 = vadd.f32 %v2661, 1.0
    %v2841 = vadd.f32 %v2663, 1.0
    %v2842 = vadd.f32 %v2665, 1.0
    %v2843 = vadd.f32 %v2667, 1.0
    %v2844 = vadd.f32 %v2669, 1.0
    %v2845 = vadd.f32 %v2671, 1.0
    %v2846 = vadd.f32 %v2673, 1.0
    %v2847 = vadd.f32 %v2675, 1.0
    %v2848 = vadd.f32 %v2677, 1.0
    %v2849 = vadd.f32 %v2679, 1.0
    %v2850 = vadd.f32 %v2681, 1.0
    %v2851 = vadd.f32 %v2683, 1.0
    %v2852 = vadd.f32 %v2685, 1.0
    %v2853 = vadd.f32 %v2687, 1.0
    %v2854 = vadd.f32 %v2689, 1.0
    %v2855 = vadd.f32 %v2691, 1.0
    %v2856 = vadd.f32 %v2693, 1.0
    %v2857 = vadd.f32 %v2695, 1.0
    %v2858 = vadd.f32 %v2697, 1.0
    %v2859 = vadd.f32 %v2699, 1.0
    %v2860 = vadd.f32 %v2701, 1.0
    %v2861 = vadd.f32 %v2703, 1.0
    %v2862 = vadd.f32 %v2705, 1.0
    %v2863 = vadd.f32 %v2707, 1.0
    %v2864 = vadd.f32 %v2709, 1.0
    %v2865 = vadd.f32 %v2711, 1.0
    %v2866 = vadd.f32 %v2713, 1.0
    %v2867 = vadd.f32 %v2715, 1.0
    %v2868 = vadd.f32 %v2717, 1.0
    %v2869 = vadd.f32 %v2719, 1.0
    %v2870 = vadd.f32 %v2721, 1.0
    %v2871 = vadd.f32 %v2723, 1.0
    %v2872 = vadd.f32 %v2725, 1.0
    %v2873 = vadd.f32 %v2727, 1.0
    %v2874 = vadd.f32 %v2729, 1.0
    %v2875 = vadd.f32 %v2731, 1.0
    %v2876 = vadd.f32 %v2733, 1.0
    %v2877 = vadd.f32 %v2735, 1.0
    %v2878 = vadd.f32 %v2737, 1.0
    %v2879 = vadd.f32 %v2739, 1.0
    %v2880 = vadd.f32 %v2741, 1.0
    %v2881 = vadd.f32 %v2743, 1.0
    %v2882 = vadd.f32 %v2745, 1.0
    %v2883 = vadd.f32 %v2747, 1.0
    %v2884 = vadd.f32 %v2749, 1.0
    %v2885 = vadd.f32 %v2751, 1.0
    %v2886 = vadd.f32 %v2753, 1.0
    %v2887 = vadd.f32 %v2755, 1.0
    %v2888 = vadd.f32 %v2757, 1.0
    %v2889 = vadd.f32 %v2759, 1.0
    %v2890 = vadd.f32 %v2761, 1.0
    %v2891 = vadd.f32 %v2763, 1.0
    %v2892 = vadd.f32 %v2765, 1.0
    %v2893 = vadd.f32 %v2767, 1.0
    %v2894 = vadd.f32 %v2769, 1.0
    %v2895 = vadd.f32 %v2771, 1.0
    %v2896 = vadd.f32 %v2773, 1.0
    %v2897 = vadd.f32 %v2775, 1.0
    %v2898 = vadd.f32 %v2777, 1.0
    %v2899 = vadd.f32 %v2779, 1.0
    %v2900 = vadd.f32 %v2781, 1.0
    %v2901 = vadd.f32 %v2783, 1.0
    %v2902 = vadd.f32 %v2785, 1.0
    %v2903 = vadd.f32 %v2787, 1.0
    %v2904 = vadd.f32 %v2789, 1.0
    %v2905 = vadd.f32 %v2791, 1.0
    %v2906 = vadd.f32 %v2793, 1.0
    %v2907 = vadd.f32 %v2795, 1.0
    %v2908 = vadd.f32 %v2797, 1.0
    %v2909 = vadd.f32 %v2799, 1.0
    %v2910 = vadd.f32 %v2801, 1.0
    %v2911 = vadd.f32 %v2803, 1.0
    %v2912 = vadd.f32 %v2805, 1.0
    %v2913 = vadd.f32 %v2807, 1.0
    %v2914 = vadd.f32 %v2809, 1.0
    %v2915 = vadd.f32 %v2811, 1.0
    %v2916 = vadd.f32 %v2813, 1.0
    %v2917 = vadd.f32 %v2815, 1.0
    %v2918 = vadd.f32 %v2817, 1.0
    %v2919 = vadd.f32 %v2819, 1.0
    %v2920 = vadd.f32 %v2821, 1.0
    %v2921 = vadd.f32 %v2823, 1.0
    %v2922 = vrcp.pop %v2824
    %v2923 = vrcp.pop %v2825
    %v2924 = vrcp.pop %v2826
    %v2925 = vrcp.pop %v2827
    %v2926 = vrcp.pop %v2828
    %v2927 = vrcp.pop %v2829
    %v2928 = vrcp.pop %v2830
    %v2929 = vrcp.pop %v2831
    %v2930 = vrcp.pop %v2832
    %v2931 = vrcp.pop %v2833
    %v2932 = vrcp.pop %v2834
    %v2933 = vrcp.pop %v2835
    %v2934 = vrcp.pop %v2836
    %v2935 = vrcp.pop %v2837
    %v2936 = vrcp.pop %v2838
    %v2937 = vrcp.pop %v2839
    %v2938 = vrcp.pop %v2840
    %v2939 = vrcp.pop %v2841
    %v2940 = vrcp.pop %v2842
    %v2941 = vrcp.pop %v2843
    %v2942 = vrcp.pop %v2844
    %v2943 = vrcp.pop %v2845
    %v2944 = vrcp.pop %v2846
    %v2945 = vrcp.pop %v2847
    %v2946 = vrcp.pop %v2848
    %v2947 = vrcp.pop %v2849
    %v2948 = vrcp.pop %v2850
    %v2949 = vrcp.pop %v2851
    %v2950 = vrcp.pop %v2852
    %v2951 = vrcp.pop %v2853
    %v2952 = vrcp.pop %v2854
    %v2953 = vrcp.pop %v2855
    %v2954 = vrcp.pop %v2856
    %v2955 = vrcp.pop %v2857
    %v2956 = vrcp.pop %v2858
    %v2957 = vrcp.pop %v2859
    %v2958 = vrcp.pop %v2860
    %v2959 = vrcp.pop %v2861
    %v2960 = vrcp.pop %v2862
    %v2961 = vrcp.pop %v2863
    %v2962 = vrcp.pop %v2864
    %v2963 = vrcp.pop %v2865
    %v2964 = vrcp.pop %v2866
    %v2965 = vrcp.pop %v2867
    %v2966 = vrcp.pop %v2868
    %v2967 = vrcp.pop %v2869
    %v2968 = vrcp.pop %v2870
    %v2969 = vrcp.pop %v2871
    %v2970 = vrcp.pop %v2872
    %v2971 = vrcp.pop %v2873
    %v2972 = vrcp.pop %v2874
    %v2973 = vrcp.pop %v2875
    %v2974 = vrcp.pop %v2876
    %v2975 = vrcp.pop %v2877
    %v2976 = vrcp.pop %v2878
    %v2977 = vrcp.pop %v2879
    %v2978 = vrcp.pop %v2880
    %v2979 = vrcp.pop %v2881
    %v2980 = vrcp.pop %v2882
    %v2981 = vrcp.pop %v2883
    %v2982 = vrcp.pop %v2884
    %v2983 = vrcp.pop %v2885
    %v2984 = vrcp.pop %v2886
    %v2985 = vrcp.pop %v2887
    %v2986 = vrcp.pop %v2888
    %v2987 = vrcp.pop %v2889
    %v2988 = vrcp.pop %v2890
    %v2989 = vrcp.pop %v2891
    %v2990 = vrcp.pop %v2892
    %v2991 = vrcp.pop %v2893
    %v2992 = vrcp.pop %v2894
    %v2993 = vrcp.pop %v2895
    %v2994 = vrcp.pop %v2896
    %v2995 = vrcp.pop %v2897
    %v2996 = vrcp.pop %v2898
    %v2997 = vrcp.pop %v2899
    %v2998 = vrcp.pop %v2900
    %v2999 = vrcp.pop %v2901
    %v3000 = vrcp.pop %v2902
    %v3001 = vrcp.pop %v2903
    %v3002 = vrcp.pop %v2904
    %v3003 = vrcp.pop %v2905
    %v3004 = vrcp.pop %v2906
    %v3005 = vrcp.pop %v2907
    %v3006 = vrcp.pop %v2908
    %v3007 = vrcp.pop %v2909
    %v3008 = vrcp.pop %v2910
    %v3009 = vrcp.pop %v2911
    %v3010 = vrcp.pop %v2912
    %v3011 = vrcp.pop %v2913
    %v3012 = vrcp.pop %v2914
    %v3013 = vrcp.pop %v2915
    %v3014 = vrcp.pop %v2916
    %v3015 = vrcp.pop %v2917
    %v3016 = vrcp.pop %v2918
    %v3017 = vrcp.pop %v2919
    %v3018 = vrcp.pop %v2920
    %v3019 = vrcp.pop %v2921
    %3020 = vst [vmem:[#allocation8] sm:$0xff] %v2922
    %3021 = vst [vmem:[#allocation8 + $0x8] sm:$0xff] %v2923
    %3022 = vst [vmem:[#allocation8 + $0x10] sm:$0xff] %v2924
    %3023 = vst [vmem:[#allocation8 + $0x18] sm:$0xff] %v2925
    %3024 = vst [vmem:[#allocation8 + $0x20] sm:$0xff] %v2926
    %3025 = vst [vmem:[#allocation8 + $0x28] sm:$0xff] %v2927
    %3026 = vst [vmem:[#allocation8 + $0x30] sm:$0xff] %v2928
    %3027 = vst [vmem:[#allocation8 + $0x38] sm:$0xff] %v2929
    %3028 = vst [vmem:[#allocation8 + $0x40] sm:$0xff] %v2930
    %3029 = vst [vmem:[#allocation8 + $0x48] sm:$0xff] %v2931
    %3030 = vst [vmem:[#allocation8 + $0x50] sm:$0xff] %v2932
    %3031 = vst [vmem:[#allocation8 + $0x58] sm:$0xff] %v2933
    %3032 = vst [vmem:[#allocation8 + $0x60] sm:$0xff] %v2934
    %3033 = vst [vmem:[#allocation8 + $0x68] sm:$0xff] %v2935
    %3034 = vst [vmem:[#allocation8 + $0x70] sm:$0xff] %v2936
    %3035 = vst [vmem:[#allocation8 + $0x78] sm:$0xff] %v2937
    %3036 = vst [vmem:[#allocation8 + $0x80] sm:$0xff] %v2938
    %3037 = vst [vmem:[#allocation8 + $0x88] sm:$0xff] %v2939
    %3038 = vst [vmem:[#allocation8 + $0x90] sm:$0xff] %v2940
    %3039 = vst [vmem:[#allocation8 + $0x98] sm:$0xff] %v2941
    %3040 = vst [vmem:[#allocation8 + $0xa0] sm:$0xff] %v2942
    %3041 = vst [vmem:[#allocation8 + $0xa8] sm:$0xff] %v2943
    %3042 = vst [vmem:[#allocation8 + $0xb0] sm:$0xff] %v2944
    %3043 = vst [vmem:[#allocation8 + $0xb8] sm:$0xff] %v2945
    %3044 = vst [vmem:[#allocation8 + $0xc0] sm:$0xff] %v2946
    %3045 = vst [vmem:[#allocation8 + $0xc8] sm:$0xff] %v2947
    %3046 = vst [vmem:[#allocation8 + $0xd0] sm:$0xff] %v2948
    %3047 = vst [vmem:[#allocation8 + $0xd8] sm:$0xff] %v2949
    %3048 = vst [vmem:[#allocation8 + $0xe0] sm:$0xff] %v2950
    %3049 = vst [vmem:[#allocation8 + $0xe8] sm:$0xff] %v2951
    %3050 = vst [vmem:[#allocation8 + $0xf0] sm:$0xff] %v2952
    %3051 = vst [vmem:[#allocation8 + $0xf8] sm:$0xff] %v2953
    %3052 = vst [vmem:[#allocation8 + $0x100] sm:$0xff] %v2954
    %3053 = vst [vmem:[#allocation8 + $0x108] sm:$0xff] %v2955
    %3054 = vst [vmem:[#allocation8 + $0x110] sm:$0xff] %v2956
    %3055 = vst [vmem:[#allocation8 + $0x118] sm:$0xff] %v2957
    %3056 = vst [vmem:[#allocation8 + $0x120] sm:$0xff] %v2958
    %3057 = vst [vmem:[#allocation8 + $0x128] sm:$0xff] %v2959
    %3058 = vst [vmem:[#allocation8 + $0x130] sm:$0xff] %v2960
    %3059 = vst [vmem:[#allocation8 + $0x138] sm:$0xff] %v2961
    %3060 = vst [vmem:[#allocation8 + $0x140] sm:$0xff] %v2962
    %3061 = vst [vmem:[#allocation8 + $0x148] sm:$0xff] %v2963
    %3062 = vst [vmem:[#allocation8 + $0x150] sm:$0xff] %v2964
    %3063 = vst [vmem:[#allocation8 + $0x158] sm:$0xff] %v2965
    %3064 = vst [vmem:[#allocation8 + $0x160] sm:$0xff] %v2966
    %3065 = vst [vmem:[#allocation8 + $0x168] sm:$0xff] %v2967
    %3066 = vst [vmem:[#allocation8 + $0x170] sm:$0xff] %v2968
    %3067 = vst [vmem:[#allocation8 + $0x178] sm:$0xff] %v2969
    %3068 = vst [vmem:[#allocation8 + $0x180] sm:$0xff] %v2970
    %3069 = vst [vmem:[#allocation8 + $0x188] sm:$0xff] %v2971
    %3070 = vst [vmem:[#allocation8 + $0x190] sm:$0xff] %v2972
    %3071 = vst [vmem:[#allocation8 + $0x198] sm:$0xff] %v2973
    %3072 = vst [vmem:[#allocation8 + $0x1a0] sm:$0xff] %v2974
    %3073 = vst [vmem:[#allocation8 + $0x1a8] sm:$0xff] %v2975
    %3074 = vst [vmem:[#allocation8 + $0x1b0] sm:$0xff] %v2976
    %3075 = vst [vmem:[#allocation8 + $0x1b8] sm:$0xff] %v2977
    %3076 = vst [vmem:[#allocation8 + $0x1c0] sm:$0xff] %v2978
    %3077 = vst [vmem:[#allocation8 + $0x1c8] sm:$0xff] %v2979
    %3078 = vst [vmem:[#allocation8 + $0x1d0] sm:$0xff] %v2980
    %3079 = vst [vmem:[#allocation8 + $0x1d8] sm:$0xff] %v2981
    %3080 = vst [vmem:[#allocation8 + $0x1e0] sm:$0xff] %v2982
    %3081 = vst [vmem:[#allocation8 + $0x1e8] sm:$0xff] %v2983
    %3082 = vst [vmem:[#allocation8 + $0x1f0] sm:$0xff] %v2984
    %3083 = vst [vmem:[#allocation8 + $0x1f8] sm:$0xff] %v2985
    %3084 = vst [vmem:[#allocation8 + $0x200] sm:$0xff] %v2986
    %3085 = vst [vmem:[#allocation8 + $0x208] sm:$0xff] %v2987
    %3086 = vst [vmem:[#allocation8 + $0x210] sm:$0xff] %v2988
    %3087 = vst [vmem:[#allocation8 + $0x218] sm:$0xff] %v2989
    %3088 = vst [vmem:[#allocation8 + $0x220] sm:$0xff] %v2990
    %3089 = vst [vmem:[#allocation8 + $0x228] sm:$0xff] %v2991
    %3090 = vst [vmem:[#allocation8 + $0x230] sm:$0xff] %v2992
    %3091 = vst [vmem:[#allocation8 + $0x238] sm:$0xff] %v2993
    %3092 = vst [vmem:[#allocation8 + $0x240] sm:$0xff] %v2994
    %3093 = vst [vmem:[#allocation8 + $0x248] sm:$0xff] %v2995
    %3094 = vst [vmem:[#allocation8 + $0x250] sm:$0xff] %v2996
    %3095 = vst [vmem:[#allocation8 + $0x258] sm:$0xff] %v2997
    %3096 = vst [vmem:[#allocation8 + $0x260] sm:$0xff] %v2998
    %3097 = vst [vmem:[#allocation8 + $0x268] sm:$0xff] %v2999
    %3098 = vst [vmem:[#allocation8 + $0x270] sm:$0xff] %v3000
    %3099 = vst [vmem:[#allocation8 + $0x278] sm:$0xff] %v3001
    %3100 = vst [vmem:[#allocation8 + $0x280] sm:$0xff] %v3002
    %3101 = vst [vmem:[#allocation8 + $0x288] sm:$0xff] %v3003
    %3102 = vst [vmem:[#allocation8 + $0x290] sm:$0xff] %v3004
    %3103 = vst [vmem:[#allocation8 + $0x298] sm:$0xff] %v3005
    %3104 = vst [vmem:[#allocation8 + $0x2a0] sm:$0xff] %v3006
    %3105 = vst [vmem:[#allocation8 + $0x2a8] sm:$0xff] %v3007
    %3106 = vst [vmem:[#allocation8 + $0x2b0] sm:$0xff] %v3008
    %3107 = vst [vmem:[#allocation8 + $0x2b8] sm:$0xff] %v3009
    %3108 = vst [vmem:[#allocation8 + $0x2c0] sm:$0xff] %v3010
    %3109 = vst [vmem:[#allocation8 + $0x2c8] sm:$0xff] %v3011
    %3110 = vst [vmem:[#allocation8 + $0x2d0] sm:$0xff] %v3012
    %3111 = vst [vmem:[#allocation8 + $0x2d8] sm:$0xff] %v3013
    %3112 = vst [vmem:[#allocation8 + $0x2e0] sm:$0xff] %v3014
    %3113 = vst [vmem:[#allocation8 + $0x2e8] sm:$0xff] %v3015
    %3114 = vst [vmem:[#allocation8 + $0x2f0] sm:$0xff] %v3016
    %3115 = vst [vmem:[#allocation8 + $0x2f8] sm:$0xff] %v3017
    %3116 = vst [vmem:[#allocation8 + $0x300] sm:$0xff] %v3018
    %3117 = vst [vmem:[#allocation8 + $0x308] sm:$0xff] %v3019
    // Predicated region
    $region58: #{tpu_custom_call.1} parent=1 // pred_check
      _
    $region59: #{tpu_custom_call.1} parent=1 // pred_check_branch
      %3119 = sbr.rel (0) target = $region61
    $region60: #{tpu_custom_call.1} parent=1 // pred_region
      %s3121 = ssub.s32 12544, 12544
      %3122 = vsyncadd [#allocation4], %s3121
      %s3123 = sshll.u32 [#allocation8], 4
      %s3124 = int_to_ptr.vmem [resolvable:$true] %s3123
      %3129 = dma.vmem_to_hbm [thread:$0]  %s3124, 12544, %s11, [#allocation4], 896, 896, 56
    $region61: #{tpu_custom_call.1} parent=1 // pred_fallthru
      _
    // Predicated region
    $region62: #{tpu_custom_call.1} parent=1 // pred_check
      _
    $region63: #{tpu_custom_call.1} parent=1 // pred_check_branch
      %3131 = sbr.rel (0) target = $region65
    $region64: #{tpu_custom_call.1} parent=1 // pred_region
      %3132 = dma.done [#allocation4], 12544
    $region65: #{tpu_custom_call.1} parent=1 // pred_fallthru
      _
    %3133 = vsyncpa [#allocation3], 1
    %3134 = vsyncpa [#allocation6], 1
    %3135 = vsyncpa [#allocation4], 1

</llo_original>
